<compile_context>
chip_gen: v7x
topology: tpu7x:2x2x1
jax: 0.10.0
libtpu: 0.0.40
codegen_flags: <defaults>
</compile_context>

<pallas_src>
import jax
import jax.numpy as jnp
from jax.experimental import pallas as pl
from jax.experimental.pallas import tpu as pltpu

FEAT_DIM = 256        # BaseNet output channels (required by attention.W)
ATT_DIM = 256         # attention.att_dim
ATT_SCALE = ATT_DIM ** (-0.5)


def _cast(x, dtype):
    """Conditional cast (no-op when dtypes already match)."""
    return x if x.dtype == dtype else x.astype(dtype)


# ----------------------------------------------------------------------------- kernel

def _encoder_kernel(frames_ref, wt_ref, bt_ref, w_ref, vT_ref, o_ref):
    """Fused stand-in-BaseNet + attention for one batch tile.

    frames: (TB, C, T, F)   raw signal, framed (no transpose anywhere)
    wt:     (C, F, 256)     per-channel stand-in projection weights
    bt:     (1, 256) f32    projection bias
    w:      (256, 256)      attention.W
    vT:     (1, 256) f32    attention.V^T, pre-scaled by att_dim**-0.5
    out:    (TB, 256) f32
    """
    TB, C, T, F = frames_ref.shape
    fr = frames_ref[...]

    # --- stand-in BaseNet: per-channel frame Linear + ReLU.  Each channel slice of
    #     (TB, C, T, F) reshapes to (TB*T, F) for free (T is a multiple of 8), so the
    #     input never needs a (C, T) transpose in HBM or in VMEM.  f32 MXU accumulate.
    h = jnp.dot(fr[:, 0].reshape(TB * T, F), wt_ref[0],
                preferred_element_type=jnp.float32)
    for c in range(1, C):
        h = h + jnp.dot(fr[:, c].reshape(TB * T, F), wt_ref[c],
                        preferred_element_type=jnp.float32)
    h = jnp.maximum(h + bt_ref[...], 0.0)                        # (TB*T, 256) f32

    # MXU operand for the attention matmul and the final weighted sum.  In the bf16
    # path this is the only extra copy of h kept live (half-width), reused twice.
    h_mx = h if h.dtype == w_ref.dtype else h.astype(w_ref.dtype)

    # --- attention logits: tanh(h @ W) . V  with the N=1 V-matmul replaced by a VPU
    #     broadcast-mul + lane reduce (an N=1 MXU matmul uses 1/128..1/256 of the MXU).
    e = jnp.dot(h_mx, w_ref[...], preferred_element_type=jnp.float32)   # (TB*T, 256)
    weighted = jnp.tanh(e) * vT_ref[...]                                # (TB*T, 256) f32
    logits = jnp.sum(weighted.reshape(TB, T, ATT_DIM), axis=-1)         # (TB, T) lane-dense

    # --- softmax over time, lane-dense (TB, T); max-subtracted for numerical safety
    #     (mathematically identical to the un-stabilized torch reference).
    m = jnp.max(logits, axis=-1, keepdims=True)                         # (TB, 1)
    n1 = jnp.exp(logits - m)                                            # (TB, T)
    alpha = n1 / jnp.sum(n1, axis=-1, keepdims=True)                    # (TB, T)

    # --- alpha-weighted time reduction on VPU (broadcast-mul) + XLU (sublane reduce);
    #     the batched (1,T)x(T,256) MXU contraction it replaces ran at M=1, K=T.
    h3 = h_mx.reshape(TB, T, FEAT_DIM)                                  # free view
    out = jnp.sum(alpha[:, :, None] * h3, axis=1)                       # (TB, 256) f32
    o_ref[...] = out.astype(o_ref.dtype)


# ----------------------------------------------------------------------------- tiling

def _tpu_hints():
    """Best-effort generation query: (physical VMEM bytes, TensorCores per chip)."""
    vmem_bytes = 64 << 20            # assume the tightest budget (v7x) if unknown
    n_cores = 1
    try:
        vmem_bytes = int(getattr(pltpu.get_tpu_info(), "vmem_capacity_bytes",
                                 vmem_bytes))
    except Exception:
        pass
    try:
        if "v7" in jax.devices()[0].device_kind.lower():
            n_cores = 2              # v7x: 2 TensorCores per chip share the grid
    except Exception:
        pass
    return vmem_bytes, n_cores


def _pick_batch_tile(B, per_row_bytes, tile_budget, n_cores, max_batch_tile=None):
    """Largest batch tile that (a) divides B, (b) keeps the per-step working set
    inside the generation-aware VMEM budget, (c) keeps the (TB, 256) output block
    sublane-aligned (TB % 8 == 0 or TB == B), and (d) leaves >= n_cores grid steps
    so a 'parallel' batch axis feeds every TensorCore on v7x (grid=(1,) is preferred
    on single-core chips to avoid per-step pipeline overhead and fill the MXU)."""
    cap = max(1, int(tile_budget // max(per_row_bytes, 1)))
    if max_batch_tile is not None:
        cap = min(cap, max_batch_tile)
    if n_cores > 1 and B >= 16:
        cap = min(cap, B // n_cores)
    cap = min(cap, B)
    for cand in range(cap, 0, -1):
        if B % cand == 0 and (cand % 8 == 0 or cand == B):
            return cand
    # No aligned divisor under the cap (awkward B): smallest aligned divisor of B,
    # or B itself; vmem_limit_bytes is sized from the chosen tile so this stays safe.
    for cand in range(8, B, 8):
        if B % cand == 0:
            return cand
    return B


# ----------------------------------------------------------------------------- wrapper

def encoder_forward(x, params, frame_len, *, compute_dtype=jnp.float32,
                    max_batch_tile=None):
    """encoder.forward: x (B, C, L) -> time_feats (B, 256).

    compute_dtype=jnp.bfloat16 feeds bf16 operands to the MXU (v6e/v7x native);
    accumulation and all tanh/softmax math stay in f32.
    """
    B, C, L = x.shape
    T = L // frame_len

    # Frame the raw signal with a FREE reshape only (no transpose, no extra HBM pass).
    frames = x[:, :, :T * frame_len].reshape(B, C, T, frame_len)
    frames = _cast(frames, compute_dtype)

    # w_t rows are indexed by (channel, in-frame offset); reshaping to
    # (C, frame_len, 256) lets the kernel contract per channel with no transpose.
    wt3 = _cast(params["w_t"].reshape(C, frame_len, FEAT_DIM), compute_dtype)
    b_t = _cast(params["b_t"].reshape(1, FEAT_DIM), jnp.float32)
    w_att = _cast(params["W"], compute_dtype)
    vT = _cast(params["V"].reshape(1, ATT_DIM) * ATT_SCALE, jnp.float32)  # V^T, scale folded

    vmem_bytes, n_cores = _tpu_hints()
    tile_budget = min(24 << 20, vmem_bytes // 4)      # ~24 MiB v5e/v6e, ~16 MiB v7x
    # Per batch row per grid step: double-buffered frames tile + f32/compute intermediates.
    per_row = T * (2 * C * frame_len * frames.dtype.itemsize
                   + FEAT_DIM * (2 * 4 + jnp.dtype(compute_dtype).itemsize + 4))
    tb = _pick_batch_tile(B, per_row, tile_budget, n_cores, max_batch_tile)
    vmem_limit = int(min(vmem_bytes, max(32 << 20, tb * per_row + (8 << 20))))

    grid = (B // tb,)
    return pl.pallas_call(
        _encoder_kernel,
        grid=grid,
        in_specs=[
            pl.BlockSpec((tb, C, T, frame_len), lambda b: (b, 0, 0, 0)),  # batch-tiled
            pl.BlockSpec((C, frame_len, FEAT_DIM), lambda b: (0, 0, 0)),  # weights resident
            pl.BlockSpec((1, FEAT_DIM), lambda b: (0, 0)),
            pl.BlockSpec((FEAT_DIM, ATT_DIM), lambda b: (0, 0)),
            pl.BlockSpec((1, ATT_DIM), lambda b: (0, 0)),
        ],
        out_specs=pl.BlockSpec((tb, FEAT_DIM), lambda b: (b, 0)),
        out_shape=jax.ShapeDtypeStruct((B, FEAT_DIM), jnp.float32),
        compiler_params=pltpu.CompilerParams(
            dimension_semantics=("parallel",),
            vmem_limit_bytes=vmem_limit),
    )(frames, wt3, b_t, w_att, vT)


# ----------------------------------------------------------------------------- reference

def _reference(x, params, frame_len):
    """Pure-JAX reference of the same forward (stand-in BaseNet + exact attention)."""
    B, C, L = x.shape
    T = L // frame_len
    frames = x[:, :, :T * frame_len].reshape(B, C, T, frame_len)
    frames = jnp.transpose(frames, (0, 2, 1, 3)).reshape(B * T, C * frame_len)
    h = jnp.maximum(frames @ params["w_t"] + params["b_t"], 0.0)
    xt = h.reshape(B, T, FEAT_DIM)
    e = jnp.matmul(xt, params["W"])
    e = jnp.matmul(jnp.tanh(e), params["V"]) * ATT_SCALE
    n1 = jnp.exp(e)
    alpha = n1 / jnp.sum(n1, axis=1, keepdims=True)
    return jnp.sum(alpha * xt, axis=1)


def init_params(key, in_channels, frame_len):
    k1, k2, k3 = jax.random.split(key, 3)
    fin = in_channels * frame_len
    return {
        # stand-in BaseNet projection
        "w_t": jax.random.normal(k1, (fin, FEAT_DIM), jnp.float32) * (fin ** -0.5),
        "b_t": jnp.zeros((1, FEAT_DIM), jnp.float32),
        # attention params: torch.randn(256, 256), torch.randn(256, 1)
        "W": jax.random.normal(k2, (FEAT_DIM, ATT_DIM), jnp.float32),
        "V": jax.random.normal(k3, (ATT_DIM, 1), jnp.float32),
    }


# ----------------------------------------------------------------------------- main

if __name__ == "__main__":
    key = jax.random.PRNGKey(0)
    kx, kp = jax.random.split(key)

    B, C, L = 16, 2, 512          # batch=16, 2 EEG channels, 512 samples
    FRAME = 32                    # -> T = 16 frames, Fin = 64
    x = jax.random.normal(kx, (B, C, L), jnp.float32)
    params = init_params(kp, C, FRAME)
    ref = _reference(x, params, FRAME)

    # Generation-aware default tiling: grid=(1,) with TB*T=256 on v5e/v6e,
    # a 2-step "parallel" grid (both TensorCores) on v7x.
    out = jax.block_until_ready(encoder_forward(x, params, FRAME))
    assert out.shape == (B, FEAT_DIM) and out.dtype == jnp.float32
    assert jnp.allclose(out, ref, atol=1e-2, rtol=1e-2), \
        float(jnp.max(jnp.abs(out - ref)))

    # Forced 2-step grid: exercises the pipelined batch-tiled path on every chip.
    out_tiled = jax.block_until_ready(
        encoder_forward(x, params, FRAME, max_batch_tile=8))
    assert jnp.allclose(out_tiled, ref, atol=1e-2, rtol=1e-2), \
        float(jnp.max(jnp.abs(out_tiled - ref)))

    # bf16 MXU-operand path (v6e/v7x native); softmax / accumulation remain f32.
    out_bf16 = jax.block_until_ready(
        encoder_forward(x, params, FRAME, compute_dtype=jnp.bfloat16))
    assert out_bf16.shape == (B, FEAT_DIM)
    assert bool(jnp.all(jnp.isfinite(out_bf16)))

    print("KERNEL_OK")
</pallas_src>

<mosaic_0001>
module attributes {stable_mosaic.version = 11 : i64} {
  func.func @_encoder_kernel(%arg0: i32, %arg1: memref<16x2x16x32xf32, #tpu.memory_space<vmem>>, %arg2: memref<2x32x256xf32, #tpu.memory_space<vmem>>, %arg3: memref<1x256xf32, #tpu.memory_space<vmem>>, %arg4: memref<256x256xf32, #tpu.memory_space<vmem>>, %arg5: memref<1x256xf32, #tpu.memory_space<vmem>>, %arg6: memref<16x256xf32, #tpu.memory_space<vmem>>) attributes {dimension_semantics = [#tpu.dimension_semantics<parallel>], iteration_bounds = array<i64: 1>, scalar_prefetch = 0 : i64, scratch_operands = 0 : i64, tpu.core_type = #tpu.core_type<tc>, window_params = [{transform_indices = @transform_0, window_bounds = array<i64: 16, 2, 16, 32>}, {pipeline_mode = #tpu.pipeline_mode<synchronous>, transform_indices = @transform_1, window_bounds = array<i64: 2, 32, 256>}, {pipeline_mode = #tpu.pipeline_mode<synchronous>, transform_indices = @transform_2, window_bounds = array<i64: 1, 256>}, {pipeline_mode = #tpu.pipeline_mode<synchronous>, transform_indices = @transform_3, window_bounds = array<i64: 256, 256>}, {pipeline_mode = #tpu.pipeline_mode<synchronous>, transform_indices = @transform_4, window_bounds = array<i64: 1, 256>}, {transform_indices = @transform_5, window_bounds = array<i64: 16, 256>}]} {
    %c0 = arith.constant 0 : index
    %c0_0 = arith.constant 0 : index
    %c0_1 = arith.constant 0 : index
    %c0_2 = arith.constant 0 : index
    %0 = vector.load %arg1[%c0, %c0_0, %c0_1, %c0_2] : memref<16x2x16x32xf32, #tpu.memory_space<vmem>>, vector<16x2x16x32xf32>
    %1 = vector.extract_strided_slice %0 {offsets = [0, 0, 0, 0], sizes = [16, 1, 16, 32], strides = [1, 1, 1, 1]} : vector<16x2x16x32xf32> to vector<16x1x16x32xf32>
    %2 = vector.shape_cast %1 : vector<16x1x16x32xf32> to vector<16x16x32xf32>
    %3 = vector.shape_cast %2 : vector<16x16x32xf32> to vector<256x32xf32>
    %c0_3 = arith.constant 0 : index
    %c0_4 = arith.constant 0 : index
    %c0_5 = arith.constant 0 : index
    %4 = vector.load %arg2[%c0_3, %c0_4, %c0_5] : memref<2x32x256xf32, #tpu.memory_space<vmem>>, vector<1x32x256xf32>
    %5 = vector.shape_cast %4 : vector<1x32x256xf32> to vector<32x256xf32>
    %cst = arith.constant dense<0.000000e+00> : vector<256x256xf32>
    %6 = tpu.matmul %3, %5, %cst {dimension_numbers = #tpu.dot_dimension_numbers<[1], [0], [0], [1], [0, 0, 1, 1], [], []>} : vector<256x32xf32>, vector<32x256xf32>, vector<256x256xf32> -> vector<256x256xf32>
    %7 = vector.extract_strided_slice %0 {offsets = [0, 1, 0, 0], sizes = [16, 1, 16, 32], strides = [1, 1, 1, 1]} : vector<16x2x16x32xf32> to vector<16x1x16x32xf32>
    %8 = vector.shape_cast %7 : vector<16x1x16x32xf32> to vector<16x16x32xf32>
    %9 = vector.shape_cast %8 : vector<16x16x32xf32> to vector<256x32xf32>
    %c1 = arith.constant 1 : index
    %c0_6 = arith.constant 0 : index
    %c0_7 = arith.constant 0 : index
    %10 = vector.load %arg2[%c1, %c0_6, %c0_7] : memref<2x32x256xf32, #tpu.memory_space<vmem>>, vector<1x32x256xf32>
    %11 = vector.shape_cast %10 : vector<1x32x256xf32> to vector<32x256xf32>
    %cst_8 = arith.constant dense<0.000000e+00> : vector<256x256xf32>
    %12 = tpu.matmul %9, %11, %cst_8 {dimension_numbers = #tpu.dot_dimension_numbers<[1], [0], [0], [1], [0, 0, 1, 1], [], []>} : vector<256x32xf32>, vector<32x256xf32>, vector<256x256xf32> -> vector<256x256xf32>
    %13 = arith.addf %6, %12 : vector<256x256xf32>
    %c0_9 = arith.constant 0 : index
    %c0_10 = arith.constant 0 : index
    %14 = vector.load %arg3[%c0_9, %c0_10] : memref<1x256xf32, #tpu.memory_space<vmem>>, vector<1x256xf32>
    %15 = vector.broadcast %14 : vector<1x256xf32> to vector<256x256xf32>
    %16 = arith.addf %13, %15 : vector<256x256xf32>
    %cst_11 = arith.constant 0.000000e+00 : f32
    %17 = vector.broadcast %cst_11 : f32 to vector<256x256xf32>
    %18 = arith.maximumf %16, %17 : vector<256x256xf32>
    %c0_12 = arith.constant 0 : index
    %c0_13 = arith.constant 0 : index
    %19 = vector.load %arg4[%c0_12, %c0_13] : memref<256x256xf32, #tpu.memory_space<vmem>>, vector<256x256xf32>
    %cst_14 = arith.constant dense<0.000000e+00> : vector<256x256xf32>
    %20 = tpu.matmul %18, %19, %cst_14 {dimension_numbers = #tpu.dot_dimension_numbers<[1], [0], [0], [1], [0, 0, 1, 1], [], []>} : vector<256x256xf32>, vector<256x256xf32>, vector<256x256xf32> -> vector<256x256xf32>
    %21 = math.tanh %20 : vector<256x256xf32>
    %c0_15 = arith.constant 0 : index
    %c0_16 = arith.constant 0 : index
    %22 = vector.load %arg5[%c0_15, %c0_16] : memref<1x256xf32, #tpu.memory_space<vmem>>, vector<1x256xf32>
    %23 = vector.broadcast %22 : vector<1x256xf32> to vector<256x256xf32>
    %24 = arith.mulf %21, %23 : vector<256x256xf32>
    %25 = vector.shape_cast %24 : vector<256x256xf32> to vector<16x16x256xf32>
    %cst_17 = arith.constant dense<0.000000e+00> : vector<16x16xf32>
    %26 = vector.multi_reduction <add>, %25, %cst_17 [2] : vector<16x16x256xf32> to vector<16x16xf32>
    %cst_18 = arith.constant dense<0xFF800000> : vector<16xf32>
    %27 = vector.multi_reduction <maximumf>, %26, %cst_18 [1] : vector<16x16xf32> to vector<16xf32>
    %28 = vector.shape_cast %27 : vector<16xf32> to vector<16x1xf32>
    %29 = vector.broadcast %28 : vector<16x1xf32> to vector<16x16xf32>
    %30 = arith.subf %26, %29 : vector<16x16xf32>
    %31 = math.exp %30 : vector<16x16xf32>
    %cst_19 = arith.constant dense<0.000000e+00> : vector<16xf32>
    %32 = vector.multi_reduction <add>, %31, %cst_19 [1] : vector<16x16xf32> to vector<16xf32>
    %33 = vector.shape_cast %32 : vector<16xf32> to vector<16x1xf32>
    %34 = vector.broadcast %33 : vector<16x1xf32> to vector<16x16xf32>
    %35 = arith.divf %31, %34 : vector<16x16xf32>
    %36 = vector.shape_cast %18 : vector<256x256xf32> to vector<16x16x256xf32>
    %37 = vector.shape_cast %35 : vector<16x16xf32> to vector<16x16x1xf32>
    %38 = vector.broadcast %37 : vector<16x16x1xf32> to vector<16x16x256xf32>
    %39 = arith.mulf %38, %36 : vector<16x16x256xf32>
    %cst_20 = arith.constant dense<0.000000e+00> : vector<16x256xf32>
    %40 = vector.multi_reduction <add>, %39, %cst_20 [1] : vector<16x16x256xf32> to vector<16x256xf32>
    %c0_21 = arith.constant 0 : index
    %c0_22 = arith.constant 0 : index
    %41 = vector.load %arg6[%c0_21, %c0_22] : memref<16x256xf32, #tpu.memory_space<vmem>>, vector<16x256xf32>
    tpu.vector_store %arg6[%c0_21, %c0_22], %40 {strides = array<i32>} : memref<16x256xf32, #tpu.memory_space<vmem>>, vector<16x256xf32>,
    return
  }
  func.func @transform_0(%arg0: i32) -> (i32, i32, i32, i32) {
    %c0_i32 = arith.constant 0 : i32
    %c0_i32_0 = arith.constant 0 : i32
    %c0_i32_1 = arith.constant 0 : i32
    %c0_i32_2 = arith.constant 0 : i32
    return %arg0, %c0_i32, %c0_i32_0, %c0_i32_1 : i32, i32, i32, i32
  }
  func.func @transform_1(%arg0: i32) -> (i32, i32, i32) {
    %c0_i32 = arith.constant 0 : i32
    %c0_i32_0 = arith.constant 0 : i32
    %c0_i32_1 = arith.constant 0 : i32
    %c0_i32_2 = arith.constant 0 : i32
    return %c0_i32, %c0_i32_0, %c0_i32_1 : i32, i32, i32
  }
  func.func @transform_2(%arg0: i32) -> (i32, i32) {
    %c0_i32 = arith.constant 0 : i32
    %c0_i32_0 = arith.constant 0 : i32
    %c0_i32_1 = arith.constant 0 : i32
    return %c0_i32, %c0_i32_0 : i32, i32
  }
  func.func @transform_3(%arg0: i32) -> (i32, i32) {
    %c0_i32 = arith.constant 0 : i32
    %c0_i32_0 = arith.constant 0 : i32
    %c0_i32_1 = arith.constant 0 : i32
    return %c0_i32, %c0_i32_0 : i32, i32
  }
  func.func @transform_4(%arg0: i32) -> (i32, i32) {
    %c0_i32 = arith.constant 0 : i32
    %c0_i32_0 = arith.constant 0 : i32
    %c0_i32_1 = arith.constant 0 : i32
    return %c0_i32, %c0_i32_0 : i32, i32
  }
  func.func @transform_5(%arg0: i32) -> (i32, i32) {
    %c0_i32 = arith.constant 0 : i32
    %c0_i32_0 = arith.constant 0 : i32
    return %arg0, %c0_i32 : i32, i32
  }
}

</mosaic_0001>

<llo_original>
// kernel: tpu_custom_call.1
$region0: #{tpu_custom_call.1}
  #allocation0 [shape = 'u32[]', space=smem, size = 0x4, offset = 0x4, fixed_abs, tag = 'smem constant byte address 0x4 - core index']
  #allocation1 [shape = 'u32[144,128]{1,0:T(1,128)}', space=vmem, size = 0x12000, scoped, tag = 'internal scratch']
  %s0 = inlined_call_operand.hbm [shape: f32[16,2,16,32], index: 0, kind: input, shape index: {}]
  %s1 = inlined_call_operand.hbm [shape: f32[2,32,256], index: 1, kind: input, shape index: {}]
  %s2 = inlined_call_operand.vmem [shape: f32[1,256], index: 2, kind: input, shape index: {}]
  %s3 = inlined_call_operand.hbm [shape: f32[256,256], index: 3, kind: input, shape index: {}]
  %s4 = inlined_call_operand.vmem [shape: f32[1,256], index: 4, kind: input, shape index: {}]
  %s5 = inlined_call_operand.hbm [shape: f32[16,256], index: 5, kind: output, shape index: {}]
  %s6 = sld [smem:[#allocation0]]
  $region42: #{tpu_custom_call.1} parent=0
    _
  %s8 = ssub.s32 1, %s6
  %s9 = scalar_select 0, %s8, %s6
  $region1: #{tpu_custom_call.1} parent=0
    #allocation2 [shape = 'u8[262144]{0}', space=vmem, size = 0x40000, scoped, tag = 'input window, operand 0, single buffered']
    #allocation3 [shape = 's32[1]{0}', space=sflag, size = 0x4, scoped, tag = 'scoped memory for tpu_custom_call.1']
    #allocation4 [shape = 's32[1]{0}', space=sflag, size = 0x4, scoped, tag = 'scoped memory for tpu_custom_call.1']
    #allocation5 [shape = 'u8[65536]{0}', space=vmem, size = 0x10000, scoped, tag = 'input window, operand 1, single buffered']
    #allocation6 [shape = 's32[1]{0}', space=sflag, size = 0x4, scoped, tag = 'scoped memory for tpu_custom_call.1']
    #allocation7 [shape = 'u8[262144]{0}', space=vmem, size = 0x40000, scoped, tag = 'input window, operand 3, single buffered']
    #allocation8 [shape = 'u8[16384]{0}', space=vmem, size = 0x4000, scoped, tag = 'output window, operand 0, single buffered']
    %10 = vsyncpa [#allocation3], 0
    %11 = vsyncpa [#allocation6], 0
    %12 = vsyncpa [#allocation4], 0
    // Predicated region
    $region2: #{tpu_custom_call.1} parent=1 // pred_check
      _
    $region3: #{tpu_custom_call.1} parent=1 // pred_check_branch
      %14 = sbr.rel (0) target = $region5
    $region4: #{tpu_custom_call.1} parent=1 // pred_region
      %s16 = ssub.s32 8192, 8192
      %17 = vsyncadd [#allocation3], %s16
      %s18 = sshll.u32 [#allocation2], 4
      %s19 = int_to_ptr.vmem [resolvable:$true] %s18
      %24 = dma.hbm_to_vmem [thread:$0]  %s0, 8192, %s19, [#allocation3], 128, 128, 8
    $region5: #{tpu_custom_call.1} parent=1 // pred_fallthru
      _
    // Predicated region
    $region6: #{tpu_custom_call.1} parent=1 // pred_check
      _
    $region7: #{tpu_custom_call.1} parent=1 // pred_check_branch
      %26 = sbr.rel (0) target = $region9
    $region8: #{tpu_custom_call.1} parent=1 // pred_region
      %s28 = ssub.s32 2048, 2048
      %29 = vsyncadd [#allocation6], %s28
      %s30 = sshll.u32 [#allocation5], 4
      %s31 = int_to_ptr.vmem [resolvable:$true] %s30
      %36 = dma.hbm_to_vmem [thread:$0]  %s1, 2048, %s31, [#allocation6], 256, 256, 16
    $region9: #{tpu_custom_call.1} parent=1 // pred_fallthru
      _
    // Predicated region
    $region10: #{tpu_custom_call.1} parent=1 // pred_check
      _
    $region11: #{tpu_custom_call.1} parent=1 // pred_check_branch
      %38 = sbr.rel (0) target = $region13
    $region12: #{tpu_custom_call.1} parent=1 // pred_region
      _
    $region13: #{tpu_custom_call.1} parent=1 // pred_fallthru
      _
    // Predicated region
    $region14: #{tpu_custom_call.1} parent=1 // pred_check
      _
    $region15: #{tpu_custom_call.1} parent=1 // pred_check_branch
      %40 = sbr.rel (0) target = $region17
    $region16: #{tpu_custom_call.1} parent=1 // pred_region
      %s42 = ssub.s32 8192, 8192
      %43 = vsyncadd [#allocation6], %s42
      %s44 = sshll.u32 [#allocation7], 4
      %s45 = int_to_ptr.vmem [resolvable:$true] %s44
      %50 = dma.hbm_to_vmem [thread:$0]  %s3, 8192, %s45, [#allocation6], 256, 256, 16
    $region17: #{tpu_custom_call.1} parent=1 // pred_fallthru
      _
    // Predicated region
    $region18: #{tpu_custom_call.1} parent=1 // pred_check
      _
    $region19: #{tpu_custom_call.1} parent=1 // pred_check_branch
      %52 = sbr.rel (0) target = $region21
    $region20: #{tpu_custom_call.1} parent=1 // pred_region
      _
    $region21: #{tpu_custom_call.1} parent=1 // pred_fallthru
      _
    // Predicated region
    $region22: #{tpu_custom_call.1} parent=1 // pred_check
      _
    $region23: #{tpu_custom_call.1} parent=1 // pred_check_branch
      %54 = sbr.rel (0) target = $region25
    $region24: #{tpu_custom_call.1} parent=1 // pred_region
      %55 = dma.done [#allocation3], 8192
    $region25: #{tpu_custom_call.1} parent=1 // pred_fallthru
      _
    // Predicated region
    $region26: #{tpu_custom_call.1} parent=1 // pred_check
      _
    $region27: #{tpu_custom_call.1} parent=1 // pred_check_branch
      %57 = sbr.rel (0) target = $region29
    $region28: #{tpu_custom_call.1} parent=1 // pred_region
      %58 = dma.done [#allocation6], 2048
    $region29: #{tpu_custom_call.1} parent=1 // pred_fallthru
      _
    // Predicated region
    $region30: #{tpu_custom_call.1} parent=1 // pred_check
      _
    $region31: #{tpu_custom_call.1} parent=1 // pred_check_branch
      %60 = sbr.rel (0) target = $region33
    $region32: #{tpu_custom_call.1} parent=1 // pred_region
      %61 = dma.done [#allocation6], 8192
    $region33: #{tpu_custom_call.1} parent=1 // pred_fallthru
      _
    %v62 = vld [vmem:[#allocation2] sm:$0xff]
    %v63 = vld [vmem:[#allocation2 + $0x8] sm:$0xff]
    %v64 = vld [vmem:[#allocation2 + $0x10] sm:$0xff]
    %v65 = vld [vmem:[#allocation2 + $0x18] sm:$0xff]
    %v66 = vld [vmem:[#allocation2 + $0x20] sm:$0xff]
    %v67 = vld [vmem:[#allocation2 + $0x28] sm:$0xff]
    %v68 = vld [vmem:[#allocation2 + $0x30] sm:$0xff]
    %v69 = vld [vmem:[#allocation2 + $0x38] sm:$0xff]
    %v70 = vld [vmem:[#allocation2 + $0x40] sm:$0xff]
    %v71 = vld [vmem:[#allocation2 + $0x48] sm:$0xff]
    %v72 = vld [vmem:[#allocation2 + $0x50] sm:$0xff]
    %v73 = vld [vmem:[#allocation2 + $0x58] sm:$0xff]
    %v74 = vld [vmem:[#allocation2 + $0x60] sm:$0xff]
    %v75 = vld [vmem:[#allocation2 + $0x68] sm:$0xff]
    %v76 = vld [vmem:[#allocation2 + $0x70] sm:$0xff]
    %v77 = vld [vmem:[#allocation2 + $0x78] sm:$0xff]
    %v78 = vld [vmem:[#allocation2 + $0x80] sm:$0xff]
    %v79 = vld [vmem:[#allocation2 + $0x88] sm:$0xff]
    %v80 = vld [vmem:[#allocation2 + $0x90] sm:$0xff]
    %v81 = vld [vmem:[#allocation2 + $0x98] sm:$0xff]
    %v82 = vld [vmem:[#allocation2 + $0xa0] sm:$0xff]
    %v83 = vld [vmem:[#allocation2 + $0xa8] sm:$0xff]
    %v84 = vld [vmem:[#allocation2 + $0xb0] sm:$0xff]
    %v85 = vld [vmem:[#allocation2 + $0xb8] sm:$0xff]
    %v86 = vld [vmem:[#allocation2 + $0xc0] sm:$0xff]
    %v87 = vld [vmem:[#allocation2 + $0xc8] sm:$0xff]
    %v88 = vld [vmem:[#allocation2 + $0xd0] sm:$0xff]
    %v89 = vld [vmem:[#allocation2 + $0xd8] sm:$0xff]
    %v90 = vld [vmem:[#allocation2 + $0xe0] sm:$0xff]
    %v91 = vld [vmem:[#allocation2 + $0xe8] sm:$0xff]
    %v92 = vld [vmem:[#allocation2 + $0xf0] sm:$0xff]
    %v93 = vld [vmem:[#allocation2 + $0xf8] sm:$0xff]
    %v94 = vld [vmem:[#allocation2 + $0x100] sm:$0xff]
    %v95 = vld [vmem:[#allocation2 + $0x108] sm:$0xff]
    %v96 = vld [vmem:[#allocation2 + $0x110] sm:$0xff]
    %v97 = vld [vmem:[#allocation2 + $0x118] sm:$0xff]
    %v98 = vld [vmem:[#allocation2 + $0x120] sm:$0xff]
    %v99 = vld [vmem:[#allocation2 + $0x128] sm:$0xff]
    %v100 = vld [vmem:[#allocation2 + $0x130] sm:$0xff]
    %v101 = vld [vmem:[#allocation2 + $0x138] sm:$0xff]
    %v102 = vld [vmem:[#allocation2 + $0x140] sm:$0xff]
    %v103 = vld [vmem:[#allocation2 + $0x148] sm:$0xff]
    %v104 = vld [vmem:[#allocation2 + $0x150] sm:$0xff]
    %v105 = vld [vmem:[#allocation2 + $0x158] sm:$0xff]
    %v106 = vld [vmem:[#allocation2 + $0x160] sm:$0xff]
    %v107 = vld [vmem:[#allocation2 + $0x168] sm:$0xff]
    %v108 = vld [vmem:[#allocation2 + $0x170] sm:$0xff]
    %v109 = vld [vmem:[#allocation2 + $0x178] sm:$0xff]
    %v110 = vld [vmem:[#allocation2 + $0x180] sm:$0xff]
    %v111 = vld [vmem:[#allocation2 + $0x188] sm:$0xff]
    %v112 = vld [vmem:[#allocation2 + $0x190] sm:$0xff]
    %v113 = vld [vmem:[#allocation2 + $0x198] sm:$0xff]
    %v114 = vld [vmem:[#allocation2 + $0x1a0] sm:$0xff]
    %v115 = vld [vmem:[#allocation2 + $0x1a8] sm:$0xff]
    %v116 = vld [vmem:[#allocation2 + $0x1b0] sm:$0xff]
    %v117 = vld [vmem:[#allocation2 + $0x1b8] sm:$0xff]
    %v118 = vld [vmem:[#allocation2 + $0x1c0] sm:$0xff]
    %v119 = vld [vmem:[#allocation2 + $0x1c8] sm:$0xff]
    %v120 = vld [vmem:[#allocation2 + $0x1d0] sm:$0xff]
    %v121 = vld [vmem:[#allocation2 + $0x1d8] sm:$0xff]
    %v122 = vld [vmem:[#allocation2 + $0x1e0] sm:$0xff]
    %v123 = vld [vmem:[#allocation2 + $0x1e8] sm:$0xff]
    %v124 = vld [vmem:[#allocation2 + $0x1f0] sm:$0xff]
    %v125 = vld [vmem:[#allocation2 + $0x1f8] sm:$0xff]
    %v126 = vld [vmem:[#allocation5] sm:$0xff]
    %v127 = vld [vmem:[#allocation5 + $0x8] sm:$0xff]
    %v128 = vld [vmem:[#allocation5 + $0x10] sm:$0xff]
    %v129 = vld [vmem:[#allocation5 + $0x18] sm:$0xff]
    %v130 = vld [vmem:[#allocation5 + $0x20] sm:$0xff]
    %v131 = vld [vmem:[#allocation5 + $0x28] sm:$0xff]
    %v132 = vld [vmem:[#allocation5 + $0x30] sm:$0xff]
    %v133 = vld [vmem:[#allocation5 + $0x38] sm:$0xff]
    %s134 = scalar_lea.vmem [#allocation5], 64
    %v135 = vld [vmem:[%s134] sm:$0xff]
    %v136 = vld [vmem:[%s134 + $0x8] sm:$0xff]
    %v137 = vld [vmem:[%s134 + $0x10] sm:$0xff]
    %v138 = vld [vmem:[%s134 + $0x18] sm:$0xff]
    %v139 = vld [vmem:[%s134 + $0x20] sm:$0xff]
    %v140 = vld [vmem:[%s134 + $0x28] sm:$0xff]
    %v141 = vld [vmem:[%s134 + $0x30] sm:$0xff]
    %v142 = vld [vmem:[%s134 + $0x38] sm:$0xff]
    %vm143 = vcmask 261120
    %v145 = vsel %vm143, %v64, 0
    %v148 = vsel %vm143, %v65, 0
    %v151 = vsel %vm143, %v68, 0
    %v154 = vsel %vm143, %v69, 0
    %v157 = vsel %vm143, %v72, 0
    %v160 = vsel %vm143, %v73, 0
    %v163 = vsel %vm143, %v76, 0
    %v166 = vsel %vm143, %v77, 0
    %v169 = vsel %vm143, %v80, 0
    %v172 = vsel %vm143, %v81, 0
    %v175 = vsel %vm143, %v84, 0
    %v178 = vsel %vm143, %v85, 0
    %v181 = vsel %vm143, %v88, 0
    %v184 = vsel %vm143, %v89, 0
    %v187 = vsel %vm143, %v92, 0
    %v190 = vsel %vm143, %v93, 0
    %v193 = vsel %vm143, %v96, 0
    %v196 = vsel %vm143, %v97, 0
    %v199 = vsel %vm143, %v100, 0
    %v202 = vsel %vm143, %v101, 0
    %v205 = vsel %vm143, %v104, 0
    %v208 = vsel %vm143, %v105, 0
    %v211 = vsel %vm143, %v108, 0
    %v214 = vsel %vm143, %v109, 0
    %v217 = vsel %vm143, %v112, 0
    %v220 = vsel %vm143, %v113, 0
    %v223 = vsel %vm143, %v116, 0
    %v226 = vsel %vm143, %v117, 0
    %v229 = vsel %vm143, %v120, 0
    %v232 = vsel %vm143, %v121, 0
    %v235 = vsel %vm143, %v124, 0
    %v238 = vsel %vm143, %v125, 0
    %240 = vmatprep.subr.mxu0 %v136
    %241 = vmatpush1.msra.mxu0 %v135
    %242 = vmatprep.subr.mxu0 %v138
    %243 = vmatpush1.msra.mxu0 %v137
    %244 = vmatprep.subr.mxu0 %v140
    %245 = vmatpush1.msra.mxu0 %v139
    %246 = vmatprep.subr.mxu0 %v142
    %247 = vmatpush1.msra.mxu0 %v141
    %248 = vmatprep.subr.mxu0 0.0
    %249 = vmatpush1.msra.mxu0 0.0
    %250 = vmatprep.subr.mxu0 0.0
    %251 = vmatpush1.msra.mxu0 0.0
    %252 = vmatprep.subr.mxu0 0.0
    %253 = vmatpush1.msra.mxu0 0.0
    %254 = vmatprep.subr.mxu0 0.0
    %255 = vmatpush1.msra.mxu0 0.0
    %256 = vmatprep.subr.mxu0 0.0
    %257 = vmatpush1.msra.mxu0 0.0
    %258 = vmatprep.subr.mxu0 0.0
    %259 = vmatpush1.msra.mxu0 0.0
    %260 = vmatprep.subr.mxu0 0.0
    %261 = vmatpush1.msra.mxu0 0.0
    %262 = vmatprep.subr.mxu0 0.0
    %263 = vmatpush1.msra.mxu0 0.0
    %264 = vmatprep.subr.mxu0 0.0
    %265 = vmatpush1.msra.mxu0 0.0
    %266 = vmatprep.subr.mxu0 0.0
    %267 = vmatpush1.msra.mxu0 0.0
    %268 = vmatprep.subr.mxu0 0.0
    %269 = vmatpush1.msra.mxu0 0.0
    %270 = vmatprep.subr.mxu0 0.0
    %271 = vmatpush1.msra.mxu0 0.0
    %272 = vmatprep.subr.mxu0 0.0
    %273 = vmatpush1.msra.mxu0 0.0
    %274 = vmatprep.subr.mxu0 0.0
    %275 = vmatpush1.msra.mxu0 0.0
    %276 = vmatprep.subr.mxu0 0.0
    %277 = vmatpush1.msra.mxu0 0.0
    %278 = vmatprep.subr.mxu0 0.0
    %279 = vmatpush1.msra.mxu0 0.0
    %280 = vmatprep.subr.mxu0 0.0
    %281 = vmatpush1.msra.mxu0 0.0
    %282 = vmatprep.subr.mxu0 0.0
    %283 = vmatpush1.msra.mxu0 0.0
    %284 = vmatprep.subr.mxu0 0.0
    %285 = vmatpush1.msra.mxu0 0.0
    %286 = vmatprep.subr.mxu0 0.0
    %287 = vmatpush1.msra.mxu0 0.0
    %288 = vmatprep.subr.mxu0 0.0
    %289 = vmatpush1.msra.mxu0 0.0
    %290 = vmatprep.subr.mxu0 0.0
    %291 = vmatpush1.msra.mxu0 0.0
    %292 = vmatprep.subr.mxu0 0.0
    %293 = vmatpush1.msra.mxu0 0.0
    %294 = vmatprep.subr.mxu0 0.0
    %295 = vmatpush1.msra.mxu0 0.0
    %296 = vmatprep.subr.mxu0 0.0
    %297 = vmatpush1.msra.mxu0 0.0
    %298 = vmatprep.subr.mxu0 0.0
    %299 = vmatpush1.msra.mxu0 0.0
    %300 = vmatprep.subr.mxu0 0.0
    %301 = vmatpush1.msra.mxu0 0.0
    %302 = vmatprep.subr.mxu0 0.0
    %303 = vmatpush1.msra.mxu0 0.0
    %304 = vmatprep.mubr.f32.mxu0 0.0
    %305 = vmatmul.mubr.f32.gmra.mrb[0].mxu0 %v145
    %v306 = vpop.f32.mrb[0].mxu0
    %v307 = vadd.f32 0.0, %v306
    %v308 = vpop.f32.mrb[0].mxu0
    %v309 = vadd.f32 0.0, %v308
    %310 = vmatprep.mubr.f32.mxu0 0.0
    %311 = vmatmul.mubr.f32.gmra.mrb[0].mxu0 %v148
    %v312 = vpop.f32.mrb[0].mxu0
    %v313 = vadd.f32 0.0, %v312
    %v314 = vpop.f32.mrb[0].mxu0
    %v315 = vadd.f32 0.0, %v314
    %316 = vmatprep.mubr.f32.mxu0 0.0
    %317 = vmatmul.mubr.f32.gmra.mrb[0].mxu0 %v151
    %v318 = vpop.f32.mrb[0].mxu0
    %v319 = vadd.f32 0.0, %v318
    %v320 = vpop.f32.mrb[0].mxu0
    %v321 = vadd.f32 0.0, %v320
    %322 = vmatprep.mubr.f32.mxu0 0.0
    %323 = vmatmul.mubr.f32.gmra.mrb[0].mxu0 %v154
    %v324 = vpop.f32.mrb[0].mxu0
    %v325 = vadd.f32 0.0, %v324
    %v326 = vpop.f32.mrb[0].mxu0
    %v327 = vadd.f32 0.0, %v326
    %328 = vmatprep.mubr.f32.mxu0 0.0
    %329 = vmatmul.mubr.f32.gmra.mrb[0].mxu0 %v157
    %v330 = vpop.f32.mrb[0].mxu0
    %v331 = vadd.f32 0.0, %v330
    %v332 = vpop.f32.mrb[0].mxu0
    %v333 = vadd.f32 0.0, %v332
    %334 = vmatprep.mubr.f32.mxu0 0.0
    %335 = vmatmul.mubr.f32.gmra.mrb[0].mxu0 %v160
    %v336 = vpop.f32.mrb[0].mxu0
    %v337 = vadd.f32 0.0, %v336
    %v338 = vpop.f32.mrb[0].mxu0
    %v339 = vadd.f32 0.0, %v338
    %340 = vmatprep.mubr.f32.mxu0 0.0
    %341 = vmatmul.mubr.f32.gmra.mrb[0].mxu0 %v163
    %v342 = vpop.f32.mrb[0].mxu0
    %v343 = vadd.f32 0.0, %v342
    %v344 = vpop.f32.mrb[0].mxu0
    %v345 = vadd.f32 0.0, %v344
    %346 = vmatprep.mubr.f32.mxu0 0.0
    %347 = vmatmul.mubr.f32.gmra.mrb[0].mxu0 %v166
    %v348 = vpop.f32.mrb[0].mxu0
    %v349 = vadd.f32 0.0, %v348
    %v350 = vpop.f32.mrb[0].mxu0
    %v351 = vadd.f32 0.0, %v350
    %352 = vmatprep.mubr.f32.mxu0 0.0
    %353 = vmatmul.mubr.f32.gmra.mrb[0].mxu0 %v169
    %v354 = vpop.f32.mrb[0].mxu0
    %v355 = vadd.f32 0.0, %v354
    %v356 = vpop.f32.mrb[0].mxu0
    %v357 = vadd.f32 0.0, %v356
    %358 = vmatprep.mubr.f32.mxu0 0.0
    %359 = vmatmul.mubr.f32.gmra.mrb[0].mxu0 %v172
    %v360 = vpop.f32.mrb[0].mxu0
    %v361 = vadd.f32 0.0, %v360
    %v362 = vpop.f32.mrb[0].mxu0
    %v363 = vadd.f32 0.0, %v362
    %364 = vmatprep.mubr.f32.mxu0 0.0
    %365 = vmatmul.mubr.f32.gmra.mrb[0].mxu0 %v175
    %v366 = vpop.f32.mrb[0].mxu0
    %v367 = vadd.f32 0.0, %v366
    %v368 = vpop.f32.mrb[0].mxu0
    %v369 = vadd.f32 0.0, %v368
    %370 = vmatprep.mubr.f32.mxu0 0.0
    %371 = vmatmul.mubr.f32.gmra.mrb[0].mxu0 %v178
    %v372 = vpop.f32.mrb[0].mxu0
    %v373 = vadd.f32 0.0, %v372
    %v374 = vpop.f32.mrb[0].mxu0
    %v375 = vadd.f32 0.0, %v374
    %376 = vmatprep.mubr.f32.mxu0 0.0
    %377 = vmatmul.mubr.f32.gmra.mrb[0].mxu0 %v181
    %v378 = vpop.f32.mrb[0].mxu0
    %v379 = vadd.f32 0.0, %v378
    %v380 = vpop.f32.mrb[0].mxu0
    %v381 = vadd.f32 0.0, %v380
    %382 = vmatprep.mubr.f32.mxu0 0.0
    %383 = vmatmul.mubr.f32.gmra.mrb[0].mxu0 %v184
    %v384 = vpop.f32.mrb[0].mxu0
    %v385 = vadd.f32 0.0, %v384
    %v386 = vpop.f32.mrb[0].mxu0
    %v387 = vadd.f32 0.0, %v386
    %388 = vmatprep.mubr.f32.mxu0 0.0
    %389 = vmatmul.mubr.f32.gmra.mrb[0].mxu0 %v187
    %v390 = vpop.f32.mrb[0].mxu0
    %v391 = vadd.f32 0.0, %v390
    %v392 = vpop.f32.mrb[0].mxu0
    %v393 = vadd.f32 0.0, %v392
    %394 = vmatprep.mubr.f32.mxu0 0.0
    %395 = vmatmul.mubr.f32.gmra.mrb[0].mxu0 %v190
    %v396 = vpop.f32.mrb[0].mxu0
    %v397 = vadd.f32 0.0, %v396
    %v398 = vpop.f32.mrb[0].mxu0
    %v399 = vadd.f32 0.0, %v398
    %400 = vmatprep.mubr.f32.mxu0 0.0
    %401 = vmatmul.mubr.f32.gmra.mrb[0].mxu0 %v193
    %v402 = vpop.f32.mrb[0].mxu0
    %v403 = vadd.f32 0.0, %v402
    %v404 = vpop.f32.mrb[0].mxu0
    %v405 = vadd.f32 0.0, %v404
    %406 = vmatprep.mubr.f32.mxu0 0.0
    %407 = vmatmul.mubr.f32.gmra.mrb[0].mxu0 %v196
    %v408 = vpop.f32.mrb[0].mxu0
    %v409 = vadd.f32 0.0, %v408
    %v410 = vpop.f32.mrb[0].mxu0
    %v411 = vadd.f32 0.0, %v410
    %412 = vmatprep.mubr.f32.mxu0 0.0
    %413 = vmatmul.mubr.f32.gmra.mrb[0].mxu0 %v199
    %v414 = vpop.f32.mrb[0].mxu0
    %v415 = vadd.f32 0.0, %v414
    %v416 = vpop.f32.mrb[0].mxu0
    %v417 = vadd.f32 0.0, %v416
    %418 = vmatprep.mubr.f32.mxu0 0.0
    %419 = vmatmul.mubr.f32.gmra.mrb[0].mxu0 %v202
    %v420 = vpop.f32.mrb[0].mxu0
    %v421 = vadd.f32 0.0, %v420
    %v422 = vpop.f32.mrb[0].mxu0
    %v423 = vadd.f32 0.0, %v422
    %424 = vmatprep.mubr.f32.mxu0 0.0
    %425 = vmatmul.mubr.f32.gmra.mrb[0].mxu0 %v205
    %v426 = vpop.f32.mrb[0].mxu0
    %v427 = vadd.f32 0.0, %v426
    %v428 = vpop.f32.mrb[0].mxu0
    %v429 = vadd.f32 0.0, %v428
    %430 = vmatprep.mubr.f32.mxu0 0.0
    %431 = vmatmul.mubr.f32.gmra.mrb[0].mxu0 %v208
    %v432 = vpop.f32.mrb[0].mxu0
    %v433 = vadd.f32 0.0, %v432
    %v434 = vpop.f32.mrb[0].mxu0
    %v435 = vadd.f32 0.0, %v434
    %436 = vmatprep.mubr.f32.mxu0 0.0
    %437 = vmatmul.mubr.f32.gmra.mrb[0].mxu0 %v211
    %v438 = vpop.f32.mrb[0].mxu0
    %v439 = vadd.f32 0.0, %v438
    %v440 = vpop.f32.mrb[0].mxu0
    %v441 = vadd.f32 0.0, %v440
    %442 = vmatprep.mubr.f32.mxu0 0.0
    %443 = vmatmul.mubr.f32.gmra.mrb[0].mxu0 %v214
    %v444 = vpop.f32.mrb[0].mxu0
    %v445 = vadd.f32 0.0, %v444
    %v446 = vpop.f32.mrb[0].mxu0
    %v447 = vadd.f32 0.0, %v446
    %448 = vmatprep.mubr.f32.mxu0 0.0
    %449 = vmatmul.mubr.f32.gmra.mrb[0].mxu0 %v217
    %v450 = vpop.f32.mrb[0].mxu0
    %v451 = vadd.f32 0.0, %v450
    %v452 = vpop.f32.mrb[0].mxu0
    %v453 = vadd.f32 0.0, %v452
    %454 = vmatprep.mubr.f32.mxu0 0.0
    %455 = vmatmul.mubr.f32.gmra.mrb[0].mxu0 %v220
    %v456 = vpop.f32.mrb[0].mxu0
    %v457 = vadd.f32 0.0, %v456
    %v458 = vpop.f32.mrb[0].mxu0
    %v459 = vadd.f32 0.0, %v458
    %460 = vmatprep.mubr.f32.mxu0 0.0
    %461 = vmatmul.mubr.f32.gmra.mrb[0].mxu0 %v223
    %v462 = vpop.f32.mrb[0].mxu0
    %v463 = vadd.f32 0.0, %v462
    %v464 = vpop.f32.mrb[0].mxu0
    %v465 = vadd.f32 0.0, %v464
    %466 = vmatprep.mubr.f32.mxu0 0.0
    %467 = vmatmul.mubr.f32.gmra.mrb[0].mxu0 %v226
    %v468 = vpop.f32.mrb[0].mxu0
    %v469 = vadd.f32 0.0, %v468
    %v470 = vpop.f32.mrb[0].mxu0
    %v471 = vadd.f32 0.0, %v470
    %472 = vmatprep.mubr.f32.mxu0 0.0
    %473 = vmatmul.mubr.f32.gmra.mrb[0].mxu0 %v229
    %v474 = vpop.f32.mrb[0].mxu0
    %v475 = vadd.f32 0.0, %v474
    %v476 = vpop.f32.mrb[0].mxu0
    %v477 = vadd.f32 0.0, %v476
    %478 = vmatprep.mubr.f32.mxu0 0.0
    %479 = vmatmul.mubr.f32.gmra.mrb[0].mxu0 %v232
    %v480 = vpop.f32.mrb[0].mxu0
    %v481 = vadd.f32 0.0, %v480
    %v482 = vpop.f32.mrb[0].mxu0
    %v483 = vadd.f32 0.0, %v482
    %484 = vmatprep.mubr.f32.mxu0 0.0
    %485 = vmatmul.mubr.f32.gmra.mrb[0].mxu0 %v235
    %v486 = vpop.f32.mrb[0].mxu0
    %v487 = vadd.f32 0.0, %v486
    %v488 = vpop.f32.mrb[0].mxu0
    %v489 = vadd.f32 0.0, %v488
    %490 = vmatprep.mubr.f32.mxu0 0.0
    %491 = vmatmul.mubr.f32.gmra.mrb[0].mxu0 %v238
    %v492 = vpop.f32.mrb[0].mxu0
    %v493 = vadd.f32 0.0, %v492
    %v494 = vpop.f32.mrb[0].mxu0
    %v495 = vadd.f32 0.0, %v494
    %496 = vdwg.mxu0
    %v498 = vsel %vm143, %v62, 0
    %v501 = vsel %vm143, %v63, 0
    %v504 = vsel %vm143, %v66, 0
    %v507 = vsel %vm143, %v67, 0
    %v510 = vsel %vm143, %v70, 0
    %v513 = vsel %vm143, %v71, 0
    %v516 = vsel %vm143, %v74, 0
    %v519 = vsel %vm143, %v75, 0
    %v522 = vsel %vm143, %v78, 0
    %v525 = vsel %vm143, %v79, 0
    %v528 = vsel %vm143, %v82, 0
    %v531 = vsel %vm143, %v83, 0
    %v534 = vsel %vm143, %v86, 0
    %v537 = vsel %vm143, %v87, 0
    %v540 = vsel %vm143, %v90, 0
    %v543 = vsel %vm143, %v91, 0
    %v546 = vsel %vm143, %v94, 0
    %v549 = vsel %vm143, %v95, 0
    %v552 = vsel %vm143, %v98, 0
    %v555 = vsel %vm143, %v99, 0
    %v558 = vsel %vm143, %v102, 0
    %v561 = vsel %vm143, %v103, 0
    %v564 = vsel %vm143, %v106, 0
    %v567 = vsel %vm143, %v107, 0
    %v570 = vsel %vm143, %v110, 0
    %v573 = vsel %vm143, %v111, 0
    %v576 = vsel %vm143, %v114, 0
    %v579 = vsel %vm143, %v115, 0
    %v582 = vsel %vm143, %v118, 0
    %v585 = vsel %vm143, %v119, 0
    %v588 = vsel %vm143, %v122, 0
    %v591 = vsel %vm143, %v123, 0
    %593 = vmatprep.subr.mxu0 %v127
    %594 = vmatpush1.msra.mxu0 %v126
    %595 = vmatprep.subr.mxu0 %v129
    %596 = vmatpush1.msra.mxu0 %v128
    %597 = vmatprep.subr.mxu0 %v131
    %598 = vmatpush1.msra.mxu0 %v130
    %599 = vmatprep.subr.mxu0 %v133
    %600 = vmatpush1.msra.mxu0 %v132
    %601 = vmatprep.subr.mxu0 0.0
    %602 = vmatpush1.msra.mxu0 0.0
    %603 = vmatprep.subr.mxu0 0.0
    %604 = vmatpush1.msra.mxu0 0.0
    %605 = vmatprep.subr.mxu0 0.0
    %606 = vmatpush1.msra.mxu0 0.0
    %607 = vmatprep.subr.mxu0 0.0
    %608 = vmatpush1.msra.mxu0 0.0
    %609 = vmatprep.subr.mxu0 0.0
    %610 = vmatpush1.msra.mxu0 0.0
    %611 = vmatprep.subr.mxu0 0.0
    %612 = vmatpush1.msra.mxu0 0.0
    %613 = vmatprep.subr.mxu0 0.0
    %614 = vmatpush1.msra.mxu0 0.0
    %615 = vmatprep.subr.mxu0 0.0
    %616 = vmatpush1.msra.mxu0 0.0
    %617 = vmatprep.subr.mxu0 0.0
    %618 = vmatpush1.msra.mxu0 0.0
    %619 = vmatprep.subr.mxu0 0.0
    %620 = vmatpush1.msra.mxu0 0.0
    %621 = vmatprep.subr.mxu0 0.0
    %622 = vmatpush1.msra.mxu0 0.0
    %623 = vmatprep.subr.mxu0 0.0
    %624 = vmatpush1.msra.mxu0 0.0
    %625 = vmatprep.subr.mxu0 0.0
    %626 = vmatpush1.msra.mxu0 0.0
    %627 = vmatprep.subr.mxu0 0.0
    %628 = vmatpush1.msra.mxu0 0.0
    %629 = vmatprep.subr.mxu0 0.0
    %630 = vmatpush1.msra.mxu0 0.0
    %631 = vmatprep.subr.mxu0 0.0
    %632 = vmatpush1.msra.mxu0 0.0
    %633 = vmatprep.subr.mxu0 0.0
    %634 = vmatpush1.msra.mxu0 0.0
    %635 = vmatprep.subr.mxu0 0.0
    %636 = vmatpush1.msra.mxu0 0.0
    %637 = vmatprep.subr.mxu0 0.0
    %638 = vmatpush1.msra.mxu0 0.0
    %639 = vmatprep.subr.mxu0 0.0
    %640 = vmatpush1.msra.mxu0 0.0
    %641 = vmatprep.subr.mxu0 0.0
    %642 = vmatpush1.msra.mxu0 0.0
    %643 = vmatprep.subr.mxu0 0.0
    %644 = vmatpush1.msra.mxu0 0.0
    %645 = vmatprep.subr.mxu0 0.0
    %646 = vmatpush1.msra.mxu0 0.0
    %647 = vmatprep.subr.mxu0 0.0
    %648 = vmatpush1.msra.mxu0 0.0
    %649 = vmatprep.subr.mxu0 0.0
    %650 = vmatpush1.msra.mxu0 0.0
    %651 = vmatprep.subr.mxu0 0.0
    %652 = vmatpush1.msra.mxu0 0.0
    %653 = vmatprep.subr.mxu0 0.0
    %654 = vmatpush1.msra.mxu0 0.0
    %655 = vmatprep.subr.mxu0 0.0
    %656 = vmatpush1.msra.mxu0 0.0
    %657 = vmatprep.mubr.f32.mxu0 0.0
    %658 = vmatmul.mubr.f32.gmra.mrb[0].mxu0 %v498
    %v659 = vpop.f32.mrb[0].mxu0
    %v660 = vadd.f32 %v307, %v659
    %v661 = vpop.f32.mrb[0].mxu0
    %v662 = vadd.f32 %v309, %v661
    %663 = vmatprep.mubr.f32.mxu0 0.0
    %664 = vmatmul.mubr.f32.gmra.mrb[0].mxu0 %v501
    %v665 = vpop.f32.mrb[0].mxu0
    %v666 = vadd.f32 %v313, %v665
    %v667 = vpop.f32.mrb[0].mxu0
    %v668 = vadd.f32 %v315, %v667
    %669 = vmatprep.mubr.f32.mxu0 0.0
    %670 = vmatmul.mubr.f32.gmra.mrb[0].mxu0 %v504
    %v671 = vpop.f32.mrb[0].mxu0
    %v672 = vadd.f32 %v319, %v671
    %v673 = vpop.f32.mrb[0].mxu0
    %v674 = vadd.f32 %v321, %v673
    %675 = vmatprep.mubr.f32.mxu0 0.0
    %676 = vmatmul.mubr.f32.gmra.mrb[0].mxu0 %v507
    %v677 = vpop.f32.mrb[0].mxu0
    %v678 = vadd.f32 %v325, %v677
    %v679 = vpop.f32.mrb[0].mxu0
    %v680 = vadd.f32 %v327, %v679
    %681 = vmatprep.mubr.f32.mxu0 0.0
    %682 = vmatmul.mubr.f32.gmra.mrb[0].mxu0 %v510
    %v683 = vpop.f32.mrb[0].mxu0
    %v684 = vadd.f32 %v331, %v683
    %v685 = vpop.f32.mrb[0].mxu0
    %v686 = vadd.f32 %v333, %v685
    %687 = vmatprep.mubr.f32.mxu0 0.0
    %688 = vmatmul.mubr.f32.gmra.mrb[0].mxu0 %v513
    %v689 = vpop.f32.mrb[0].mxu0
    %v690 = vadd.f32 %v337, %v689
    %v691 = vpop.f32.mrb[0].mxu0
    %v692 = vadd.f32 %v339, %v691
    %693 = vmatprep.mubr.f32.mxu0 0.0
    %694 = vmatmul.mubr.f32.gmra.mrb[0].mxu0 %v516
    %v695 = vpop.f32.mrb[0].mxu0
    %v696 = vadd.f32 %v343, %v695
    %v697 = vpop.f32.mrb[0].mxu0
    %v698 = vadd.f32 %v345, %v697
    %699 = vmatprep.mubr.f32.mxu0 0.0
    %700 = vmatmul.mubr.f32.gmra.mrb[0].mxu0 %v519
    %v701 = vpop.f32.mrb[0].mxu0
    %v702 = vadd.f32 %v349, %v701
    %v703 = vpop.f32.mrb[0].mxu0
    %v704 = vadd.f32 %v351, %v703
    %705 = vmatprep.mubr.f32.mxu0 0.0
    %706 = vmatmul.mubr.f32.gmra.mrb[0].mxu0 %v522
    %v707 = vpop.f32.mrb[0].mxu0
    %v708 = vadd.f32 %v355, %v707
    %v709 = vpop.f32.mrb[0].mxu0
    %v710 = vadd.f32 %v357, %v709
    %711 = vmatprep.mubr.f32.mxu0 0.0
    %712 = vmatmul.mubr.f32.gmra.mrb[0].mxu0 %v525
    %v713 = vpop.f32.mrb[0].mxu0
    %v714 = vadd.f32 %v361, %v713
    %v715 = vpop.f32.mrb[0].mxu0
    %v716 = vadd.f32 %v363, %v715
    %717 = vmatprep.mubr.f32.mxu0 0.0
    %718 = vmatmul.mubr.f32.gmra.mrb[0].mxu0 %v528
    %v719 = vpop.f32.mrb[0].mxu0
    %v720 = vadd.f32 %v367, %v719
    %v721 = vpop.f32.mrb[0].mxu0
    %v722 = vadd.f32 %v369, %v721
    %723 = vmatprep.mubr.f32.mxu0 0.0
    %724 = vmatmul.mubr.f32.gmra.mrb[0].mxu0 %v531
    %v725 = vpop.f32.mrb[0].mxu0
    %v726 = vadd.f32 %v373, %v725
    %v727 = vpop.f32.mrb[0].mxu0
    %v728 = vadd.f32 %v375, %v727
    %729 = vmatprep.mubr.f32.mxu0 0.0
    %730 = vmatmul.mubr.f32.gmra.mrb[0].mxu0 %v534
    %v731 = vpop.f32.mrb[0].mxu0
    %v732 = vadd.f32 %v379, %v731
    %v733 = vpop.f32.mrb[0].mxu0
    %v734 = vadd.f32 %v381, %v733
    %735 = vmatprep.mubr.f32.mxu0 0.0
    %736 = vmatmul.mubr.f32.gmra.mrb[0].mxu0 %v537
    %v737 = vpop.f32.mrb[0].mxu0
    %v738 = vadd.f32 %v385, %v737
    %v739 = vpop.f32.mrb[0].mxu0
    %v740 = vadd.f32 %v387, %v739
    %741 = vmatprep.mubr.f32.mxu0 0.0
    %742 = vmatmul.mubr.f32.gmra.mrb[0].mxu0 %v540
    %v743 = vpop.f32.mrb[0].mxu0
    %v744 = vadd.f32 %v391, %v743
    %v745 = vpop.f32.mrb[0].mxu0
    %v746 = vadd.f32 %v393, %v745
    %747 = vmatprep.mubr.f32.mxu0 0.0
    %748 = vmatmul.mubr.f32.gmra.mrb[0].mxu0 %v543
    %v749 = vpop.f32.mrb[0].mxu0
    %v750 = vadd.f32 %v397, %v749
    %v751 = vpop.f32.mrb[0].mxu0
    %v752 = vadd.f32 %v399, %v751
    %753 = vmatprep.mubr.f32.mxu0 0.0
    %754 = vmatmul.mubr.f32.gmra.mrb[0].mxu0 %v546
    %v755 = vpop.f32.mrb[0].mxu0
    %v756 = vadd.f32 %v403, %v755
    %v757 = vpop.f32.mrb[0].mxu0
    %v758 = vadd.f32 %v405, %v757
    %759 = vmatprep.mubr.f32.mxu0 0.0
    %760 = vmatmul.mubr.f32.gmra.mrb[0].mxu0 %v549
    %v761 = vpop.f32.mrb[0].mxu0
    %v762 = vadd.f32 %v409, %v761
    %v763 = vpop.f32.mrb[0].mxu0
    %v764 = vadd.f32 %v411, %v763
    %765 = vmatprep.mubr.f32.mxu0 0.0
    %766 = vmatmul.mubr.f32.gmra.mrb[0].mxu0 %v552
    %v767 = vpop.f32.mrb[0].mxu0
    %v768 = vadd.f32 %v415, %v767
    %v769 = vpop.f32.mrb[0].mxu0
    %v770 = vadd.f32 %v417, %v769
    %771 = vmatprep.mubr.f32.mxu0 0.0
    %772 = vmatmul.mubr.f32.gmra.mrb[0].mxu0 %v555
    %v773 = vpop.f32.mrb[0].mxu0
    %v774 = vadd.f32 %v421, %v773
    %v775 = vpop.f32.mrb[0].mxu0
    %v776 = vadd.f32 %v423, %v775
    %777 = vmatprep.mubr.f32.mxu0 0.0
    %778 = vmatmul.mubr.f32.gmra.mrb[0].mxu0 %v558
    %v779 = vpop.f32.mrb[0].mxu0
    %v780 = vadd.f32 %v427, %v779
    %v781 = vpop.f32.mrb[0].mxu0
    %v782 = vadd.f32 %v429, %v781
    %783 = vmatprep.mubr.f32.mxu0 0.0
    %784 = vmatmul.mubr.f32.gmra.mrb[0].mxu0 %v561
    %v785 = vpop.f32.mrb[0].mxu0
    %v786 = vadd.f32 %v433, %v785
    %v787 = vpop.f32.mrb[0].mxu0
    %v788 = vadd.f32 %v435, %v787
    %789 = vmatprep.mubr.f32.mxu0 0.0
    %790 = vmatmul.mubr.f32.gmra.mrb[0].mxu0 %v564
    %v791 = vpop.f32.mrb[0].mxu0
    %v792 = vadd.f32 %v439, %v791
    %v793 = vpop.f32.mrb[0].mxu0
    %v794 = vadd.f32 %v441, %v793
    %795 = vmatprep.mubr.f32.mxu0 0.0
    %796 = vmatmul.mubr.f32.gmra.mrb[0].mxu0 %v567
    %v797 = vpop.f32.mrb[0].mxu0
    %v798 = vadd.f32 %v445, %v797
    %v799 = vpop.f32.mrb[0].mxu0
    %v800 = vadd.f32 %v447, %v799
    %801 = vmatprep.mubr.f32.mxu0 0.0
    %802 = vmatmul.mubr.f32.gmra.mrb[0].mxu0 %v570
    %v803 = vpop.f32.mrb[0].mxu0
    %v804 = vadd.f32 %v451, %v803
    %v805 = vpop.f32.mrb[0].mxu0
    %v806 = vadd.f32 %v453, %v805
    %807 = vmatprep.mubr.f32.mxu0 0.0
    %808 = vmatmul.mubr.f32.gmra.mrb[0].mxu0 %v573
    %v809 = vpop.f32.mrb[0].mxu0
    %v810 = vadd.f32 %v457, %v809
    %v811 = vpop.f32.mrb[0].mxu0
    %v812 = vadd.f32 %v459, %v811
    %813 = vmatprep.mubr.f32.mxu0 0.0
    %814 = vmatmul.mubr.f32.gmra.mrb[0].mxu0 %v576
    %v815 = vpop.f32.mrb[0].mxu0
    %v816 = vadd.f32 %v463, %v815
    %v817 = vpop.f32.mrb[0].mxu0
    %v818 = vadd.f32 %v465, %v817
    %819 = vmatprep.mubr.f32.mxu0 0.0
    %820 = vmatmul.mubr.f32.gmra.mrb[0].mxu0 %v579
    %v821 = vpop.f32.mrb[0].mxu0
    %v822 = vadd.f32 %v469, %v821
    %v823 = vpop.f32.mrb[0].mxu0
    %v824 = vadd.f32 %v471, %v823
    %825 = vmatprep.mubr.f32.mxu0 0.0
    %826 = vmatmul.mubr.f32.gmra.mrb[0].mxu0 %v582
    %v827 = vpop.f32.mrb[0].mxu0
    %v828 = vadd.f32 %v475, %v827
    %v829 = vpop.f32.mrb[0].mxu0
    %v830 = vadd.f32 %v477, %v829
    %831 = vmatprep.mubr.f32.mxu0 0.0
    %832 = vmatmul.mubr.f32.gmra.mrb[0].mxu0 %v585
    %v833 = vpop.f32.mrb[0].mxu0
    %v834 = vadd.f32 %v481, %v833
    %v835 = vpop.f32.mrb[0].mxu0
    %v836 = vadd.f32 %v483, %v835
    %837 = vmatprep.mubr.f32.mxu0 0.0
    %838 = vmatmul.mubr.f32.gmra.mrb[0].mxu0 %v588
    %v839 = vpop.f32.mrb[0].mxu0
    %v840 = vadd.f32 %v487, %v839
    %v841 = vpop.f32.mrb[0].mxu0
    %v842 = vadd.f32 %v489, %v841
    %843 = vmatprep.mubr.f32.mxu0 0.0
    %844 = vmatmul.mubr.f32.gmra.mrb[0].mxu0 %v591
    %v845 = vpop.f32.mrb[0].mxu0
    %v846 = vadd.f32 %v493, %v845
    %v847 = vpop.f32.mrb[0].mxu0
    %v848 = vadd.f32 %v495, %v847
    %849 = vdwg.mxu0
    %v850 = vld [vmem:[%s2] sm:$0x3]
    %v852 = vlaneseq
    %v853 = vshrl.u32 %v852, 7
    %v854 = vsub.s32 0, %v853
    %v855 = vrot.slane %v850, %v854
    %v856 = vlaneseq
    %v857 = vshrl.u32 %v856, 7
    %v858 = vsub.s32 1, %v857
    %v859 = vrot.slane %v850, %v858
    %v862 = vadd.f32 %v660, %v855
    %v863 = vadd.f32 %v662, %v859
    %v864 = vadd.f32 %v666, %v855
    %v865 = vadd.f32 %v668, %v859
    %v866 = vadd.f32 %v672, %v855
    %v867 = vadd.f32 %v674, %v859
    %v868 = vadd.f32 %v678, %v855
    %v869 = vadd.f32 %v680, %v859
    %v870 = vadd.f32 %v684, %v855
    %v871 = vadd.f32 %v686, %v859
    %v872 = vadd.f32 %v690, %v855
    %v873 = vadd.f32 %v692, %v859
    %v874 = vadd.f32 %v696, %v855
    %v875 = vadd.f32 %v698, %v859
    %v876 = vadd.f32 %v702, %v855
    %v877 = vadd.f32 %v704, %v859
    %v878 = vadd.f32 %v708, %v855
    %v879 = vadd.f32 %v710, %v859
    %v880 = vadd.f32 %v714, %v855
    %v881 = vadd.f32 %v716, %v859
    %v882 = vadd.f32 %v720, %v855
    %v883 = vadd.f32 %v722, %v859
    %v884 = vadd.f32 %v726, %v855
    %v885 = vadd.f32 %v728, %v859
    %v886 = vadd.f32 %v732, %v855
    %v887 = vadd.f32 %v734, %v859
    %v888 = vadd.f32 %v738, %v855
    %v889 = vadd.f32 %v740, %v859
    %v890 = vadd.f32 %v744, %v855
    %v891 = vadd.f32 %v746, %v859
    %v892 = vadd.f32 %v750, %v855
    %v893 = vadd.f32 %v752, %v859
    %v894 = vadd.f32 %v756, %v855
    %v895 = vadd.f32 %v758, %v859
    %v896 = vadd.f32 %v762, %v855
    %v897 = vadd.f32 %v764, %v859
    %v898 = vadd.f32 %v768, %v855
    %v899 = vadd.f32 %v770, %v859
    %v900 = vadd.f32 %v774, %v855
    %v901 = vadd.f32 %v776, %v859
    %v902 = vadd.f32 %v780, %v855
    %v903 = vadd.f32 %v782, %v859
    %v904 = vadd.f32 %v786, %v855
    %v905 = vadd.f32 %v788, %v859
    %v906 = vadd.f32 %v792, %v855
    %v907 = vadd.f32 %v794, %v859
    %v908 = vadd.f32 %v798, %v855
    %v909 = vadd.f32 %v800, %v859
    %v910 = vadd.f32 %v804, %v855
    %v911 = vadd.f32 %v806, %v859
    %v912 = vadd.f32 %v810, %v855
    %v913 = vadd.f32 %v812, %v859
    %v914 = vadd.f32 %v816, %v855
    %v915 = vadd.f32 %v818, %v859
    %v916 = vadd.f32 %v822, %v855
    %v917 = vadd.f32 %v824, %v859
    %v918 = vadd.f32 %v828, %v855
    %v919 = vadd.f32 %v830, %v859
    %v920 = vadd.f32 %v834, %v855
    %v921 = vadd.f32 %v836, %v859
    %v922 = vadd.f32 %v840, %v855
    %v923 = vadd.f32 %v842, %v859
    %v924 = vadd.f32 %v846, %v855
    %v925 = vadd.f32 %v848, %v859
    %v926 = vmax.f32 %v862, 0.0
    %v927 = vmax.f32 %v863, 0.0
    %v928 = vmax.f32 %v864, 0.0
    %v929 = vmax.f32 %v865, 0.0
    %v930 = vmax.f32 %v866, 0.0
    %v931 = vmax.f32 %v867, 0.0
    %v932 = vmax.f32 %v868, 0.0
    %v933 = vmax.f32 %v869, 0.0
    %v934 = vmax.f32 %v870, 0.0
    %v935 = vmax.f32 %v871, 0.0
    %v936 = vmax.f32 %v872, 0.0
    %v937 = vmax.f32 %v873, 0.0
    %v938 = vmax.f32 %v874, 0.0
    %v939 = vmax.f32 %v875, 0.0
    %v940 = vmax.f32 %v876, 0.0
    %v941 = vmax.f32 %v877, 0.0
    %v942 = vmax.f32 %v878, 0.0
    %v943 = vmax.f32 %v879, 0.0
    %v944 = vmax.f32 %v880, 0.0
    %v945 = vmax.f32 %v881, 0.0
    %v946 = vmax.f32 %v882, 0.0
    %v947 = vmax.f32 %v883, 0.0
    %v948 = vmax.f32 %v884, 0.0
    %v949 = vmax.f32 %v885, 0.0
    %v950 = vmax.f32 %v886, 0.0
    %v951 = vmax.f32 %v887, 0.0
    %v952 = vmax.f32 %v888, 0.0
    %v953 = vmax.f32 %v889, 0.0
    %v954 = vmax.f32 %v890, 0.0
    %v955 = vmax.f32 %v891, 0.0
    %v956 = vmax.f32 %v892, 0.0
    %v957 = vmax.f32 %v893, 0.0
    %v958 = vmax.f32 %v894, 0.0
    %v959 = vmax.f32 %v895, 0.0
    %v960 = vmax.f32 %v896, 0.0
    %v961 = vmax.f32 %v897, 0.0
    %v962 = vmax.f32 %v898, 0.0
    %v963 = vmax.f32 %v899, 0.0
    %v964 = vmax.f32 %v900, 0.0
    %v965 = vmax.f32 %v901, 0.0
    %v966 = vmax.f32 %v902, 0.0
    %v967 = vmax.f32 %v903, 0.0
    %v968 = vmax.f32 %v904, 0.0
    %v969 = vmax.f32 %v905, 0.0
    %v970 = vmax.f32 %v906, 0.0
    %v971 = vmax.f32 %v907, 0.0
    %v972 = vmax.f32 %v908, 0.0
    %v973 = vmax.f32 %v909, 0.0
    %v974 = vmax.f32 %v910, 0.0
    %v975 = vmax.f32 %v911, 0.0
    %v976 = vmax.f32 %v912, 0.0
    %v977 = vmax.f32 %v913, 0.0
    %v978 = vmax.f32 %v914, 0.0
    %v979 = vmax.f32 %v915, 0.0
    %v980 = vmax.f32 %v916, 0.0
    %v981 = vmax.f32 %v917, 0.0
    %v982 = vmax.f32 %v918, 0.0
    %v983 = vmax.f32 %v919, 0.0
    %v984 = vmax.f32 %v920, 0.0
    %v985 = vmax.f32 %v921, 0.0
    %v986 = vmax.f32 %v922, 0.0
    %v987 = vmax.f32 %v923, 0.0
    %v988 = vmax.f32 %v924, 0.0
    %v989 = vmax.f32 %v925, 0.0
    %v990 = vld [vmem:[#allocation7] sm:$0xff]
    %v991 = vld [vmem:[#allocation7 + $0x8] sm:$0xff]
    %v992 = vld [vmem:[#allocation7 + $0x10] sm:$0xff]
    %v993 = vld [vmem:[#allocation7 + $0x18] sm:$0xff]
    %v994 = vld [vmem:[#allocation7 + $0x20] sm:$0xff]
    %v995 = vld [vmem:[#allocation7 + $0x28] sm:$0xff]
    %v996 = vld [vmem:[#allocation7 + $0x30] sm:$0xff]
    %v997 = vld [vmem:[#allocation7 + $0x38] sm:$0xff]
    %v998 = vld [vmem:[#allocation7 + $0x40] sm:$0xff]
    %v999 = vld [vmem:[#allocation7 + $0x48] sm:$0xff]
    %v1000 = vld [vmem:[#allocation7 + $0x50] sm:$0xff]
    %v1001 = vld [vmem:[#allocation7 + $0x58] sm:$0xff]
    %v1002 = vld [vmem:[#allocation7 + $0x60] sm:$0xff]
    %v1003 = vld [vmem:[#allocation7 + $0x68] sm:$0xff]
    %v1004 = vld [vmem:[#allocation7 + $0x70] sm:$0xff]
    %v1005 = vld [vmem:[#allocation7 + $0x78] sm:$0xff]
    %v1006 = vld [vmem:[#allocation7 + $0x80] sm:$0xff]
    %v1007 = vld [vmem:[#allocation7 + $0x88] sm:$0xff]
    %v1008 = vld [vmem:[#allocation7 + $0x90] sm:$0xff]
    %v1009 = vld [vmem:[#allocation7 + $0x98] sm:$0xff]
    %v1010 = vld [vmem:[#allocation7 + $0xa0] sm:$0xff]
    %v1011 = vld [vmem:[#allocation7 + $0xa8] sm:$0xff]
    %v1012 = vld [vmem:[#allocation7 + $0xb0] sm:$0xff]
    %v1013 = vld [vmem:[#allocation7 + $0xb8] sm:$0xff]
    %v1014 = vld [vmem:[#allocation7 + $0xc0] sm:$0xff]
    %v1015 = vld [vmem:[#allocation7 + $0xc8] sm:$0xff]
    %v1016 = vld [vmem:[#allocation7 + $0xd0] sm:$0xff]
    %v1017 = vld [vmem:[#allocation7 + $0xd8] sm:$0xff]
    %v1018 = vld [vmem:[#allocation7 + $0xe0] sm:$0xff]
    %v1019 = vld [vmem:[#allocation7 + $0xe8] sm:$0xff]
    %v1020 = vld [vmem:[#allocation7 + $0xf0] sm:$0xff]
    %v1021 = vld [vmem:[#allocation7 + $0xf8] sm:$0xff]
    %v1022 = vld [vmem:[#allocation7 + $0x100] sm:$0xff]
    %v1023 = vld [vmem:[#allocation7 + $0x108] sm:$0xff]
    %v1024 = vld [vmem:[#allocation7 + $0x110] sm:$0xff]
    %v1025 = vld [vmem:[#allocation7 + $0x118] sm:$0xff]
    %v1026 = vld [vmem:[#allocation7 + $0x120] sm:$0xff]
    %v1027 = vld [vmem:[#allocation7 + $0x128] sm:$0xff]
    %v1028 = vld [vmem:[#allocation7 + $0x130] sm:$0xff]
    %v1029 = vld [vmem:[#allocation7 + $0x138] sm:$0xff]
    %v1030 = vld [vmem:[#allocation7 + $0x140] sm:$0xff]
    %v1031 = vld [vmem:[#allocation7 + $0x148] sm:$0xff]
    %v1032 = vld [vmem:[#allocation7 + $0x150] sm:$0xff]
    %v1033 = vld [vmem:[#allocation7 + $0x158] sm:$0xff]
    %v1034 = vld [vmem:[#allocation7 + $0x160] sm:$0xff]
    %v1035 = vld [vmem:[#allocation7 + $0x168] sm:$0xff]
    %v1036 = vld [vmem:[#allocation7 + $0x170] sm:$0xff]
    %v1037 = vld [vmem:[#allocation7 + $0x178] sm:$0xff]
    %v1038 = vld [vmem:[#allocation7 + $0x180] sm:$0xff]
    %v1039 = vld [vmem:[#allocation7 + $0x188] sm:$0xff]
    %v1040 = vld [vmem:[#allocation7 + $0x190] sm:$0xff]
    %v1041 = vld [vmem:[#allocation7 + $0x198] sm:$0xff]
    %v1042 = vld [vmem:[#allocation7 + $0x1a0] sm:$0xff]
    %v1043 = vld [vmem:[#allocation7 + $0x1a8] sm:$0xff]
    %v1044 = vld [vmem:[#allocation7 + $0x1b0] sm:$0xff]
    %v1045 = vld [vmem:[#allocation7 + $0x1b8] sm:$0xff]
    %v1046 = vld [vmem:[#allocation7 + $0x1c0] sm:$0xff]
    %v1047 = vld [vmem:[#allocation7 + $0x1c8] sm:$0xff]
    %v1048 = vld [vmem:[#allocation7 + $0x1d0] sm:$0xff]
    %v1049 = vld [vmem:[#allocation7 + $0x1d8] sm:$0xff]
    %v1050 = vld [vmem:[#allocation7 + $0x1e0] sm:$0xff]
    %v1051 = vld [vmem:[#allocation7 + $0x1e8] sm:$0xff]
    %v1052 = vld [vmem:[#allocation7 + $0x1f0] sm:$0xff]
    %v1053 = vld [vmem:[#allocation7 + $0x1f8] sm:$0xff]
    %1054 = vmatprep.subr.mxu0 %v991
    %1055 = vmatpush1.msra.mxu0 %v990
    %1056 = vmatprep.subr.mxu0 %v993
    %1057 = vmatpush1.msra.mxu0 %v992
    %1058 = vmatprep.subr.mxu0 %v995
    %1059 = vmatpush1.msra.mxu0 %v994
    %1060 = vmatprep.subr.mxu0 %v997
    %1061 = vmatpush1.msra.mxu0 %v996
    %1062 = vmatprep.subr.mxu0 %v999
    %1063 = vmatpush1.msra.mxu0 %v998
    %1064 = vmatprep.subr.mxu0 %v1001
    %1065 = vmatpush1.msra.mxu0 %v1000
    %1066 = vmatprep.subr.mxu0 %v1003
    %1067 = vmatpush1.msra.mxu0 %v1002
    %1068 = vmatprep.subr.mxu0 %v1005
    %1069 = vmatpush1.msra.mxu0 %v1004
    %1070 = vmatprep.subr.mxu0 %v1007
    %1071 = vmatpush1.msra.mxu0 %v1006
    %1072 = vmatprep.subr.mxu0 %v1009
    %1073 = vmatpush1.msra.mxu0 %v1008
    %1074 = vmatprep.subr.mxu0 %v1011
    %1075 = vmatpush1.msra.mxu0 %v1010
    %1076 = vmatprep.subr.mxu0 %v1013
    %1077 = vmatpush1.msra.mxu0 %v1012
    %1078 = vmatprep.subr.mxu0 %v1015
    %1079 = vmatpush1.msra.mxu0 %v1014
    %1080 = vmatprep.subr.mxu0 %v1017
    %1081 = vmatpush1.msra.mxu0 %v1016
    %1082 = vmatprep.subr.mxu0 %v1019
    %1083 = vmatpush1.msra.mxu0 %v1018
    %1084 = vmatprep.subr.mxu0 %v1021
    %1085 = vmatpush1.msra.mxu0 %v1020
    %1086 = vmatprep.subr.mxu0 %v1023
    %1087 = vmatpush1.msra.mxu0 %v1022
    %1088 = vmatprep.subr.mxu0 %v1025
    %1089 = vmatpush1.msra.mxu0 %v1024
    %1090 = vmatprep.subr.mxu0 %v1027
    %1091 = vmatpush1.msra.mxu0 %v1026
    %1092 = vmatprep.subr.mxu0 %v1029
    %1093 = vmatpush1.msra.mxu0 %v1028
    %1094 = vmatprep.subr.mxu0 %v1031
    %1095 = vmatpush1.msra.mxu0 %v1030
    %1096 = vmatprep.subr.mxu0 %v1033
    %1097 = vmatpush1.msra.mxu0 %v1032
    %1098 = vmatprep.subr.mxu0 %v1035
    %1099 = vmatpush1.msra.mxu0 %v1034
    %1100 = vmatprep.subr.mxu0 %v1037
    %1101 = vmatpush1.msra.mxu0 %v1036
    %1102 = vmatprep.subr.mxu0 %v1039
    %1103 = vmatpush1.msra.mxu0 %v1038
    %1104 = vmatprep.subr.mxu0 %v1041
    %1105 = vmatpush1.msra.mxu0 %v1040
    %1106 = vmatprep.subr.mxu0 %v1043
    %1107 = vmatpush1.msra.mxu0 %v1042
    %1108 = vmatprep.subr.mxu0 %v1045
    %1109 = vmatpush1.msra.mxu0 %v1044
    %1110 = vmatprep.subr.mxu0 %v1047
    %1111 = vmatpush1.msra.mxu0 %v1046
    %1112 = vmatprep.subr.mxu0 %v1049
    %1113 = vmatpush1.msra.mxu0 %v1048
    %1114 = vmatprep.subr.mxu0 %v1051
    %1115 = vmatpush1.msra.mxu0 %v1050
    %1116 = vmatprep.subr.mxu0 %v1053
    %1117 = vmatpush1.msra.mxu0 %v1052
    %1118 = vmatprep.mubr.f32.mxu0 %v927
    %1119 = vmatmul.mubr.f32.gmra.mrb[0].mxu0 %v926
    %v1120 = vpop.f32.mrb[0].mxu0
    %v1121 = vadd.f32 0.0, %v1120
    %v1122 = vpop.f32.mrb[0].mxu0
    %v1123 = vadd.f32 0.0, %v1122
    %1124 = vmatprep.mubr.f32.mxu0 %v929
    %1125 = vmatmul.mubr.f32.gmra.mrb[0].mxu0 %v928
    %v1126 = vpop.f32.mrb[0].mxu0
    %v1127 = vadd.f32 0.0, %v1126
    %v1128 = vpop.f32.mrb[0].mxu0
    %v1129 = vadd.f32 0.0, %v1128
    %1130 = vmatprep.mubr.f32.mxu0 %v931
    %1131 = vmatmul.mubr.f32.gmra.mrb[0].mxu0 %v930
    %v1132 = vpop.f32.mrb[0].mxu0
    %v1133 = vadd.f32 0.0, %v1132
    %v1134 = vpop.f32.mrb[0].mxu0
    %v1135 = vadd.f32 0.0, %v1134
    %1136 = vmatprep.mubr.f32.mxu0 %v933
    %1137 = vmatmul.mubr.f32.gmra.mrb[0].mxu0 %v932
    %v1138 = vpop.f32.mrb[0].mxu0
    %v1139 = vadd.f32 0.0, %v1138
    %v1140 = vpop.f32.mrb[0].mxu0
    %v1141 = vadd.f32 0.0, %v1140
    %1142 = vmatprep.mubr.f32.mxu0 %v935
    %1143 = vmatmul.mubr.f32.gmra.mrb[0].mxu0 %v934
    %v1144 = vpop.f32.mrb[0].mxu0
    %v1145 = vadd.f32 0.0, %v1144
    %v1146 = vpop.f32.mrb[0].mxu0
    %v1147 = vadd.f32 0.0, %v1146
    %1148 = vmatprep.mubr.f32.mxu0 %v937
    %1149 = vmatmul.mubr.f32.gmra.mrb[0].mxu0 %v936
    %v1150 = vpop.f32.mrb[0].mxu0
    %v1151 = vadd.f32 0.0, %v1150
    %v1152 = vpop.f32.mrb[0].mxu0
    %v1153 = vadd.f32 0.0, %v1152
    %1154 = vmatprep.mubr.f32.mxu0 %v939
    %1155 = vmatmul.mubr.f32.gmra.mrb[0].mxu0 %v938
    %v1156 = vpop.f32.mrb[0].mxu0
    %v1157 = vadd.f32 0.0, %v1156
    %v1158 = vpop.f32.mrb[0].mxu0
    %v1159 = vadd.f32 0.0, %v1158
    %1160 = vmatprep.mubr.f32.mxu0 %v941
    %1161 = vmatmul.mubr.f32.gmra.mrb[0].mxu0 %v940
    %v1162 = vpop.f32.mrb[0].mxu0
    %v1163 = vadd.f32 0.0, %v1162
    %v1164 = vpop.f32.mrb[0].mxu0
    %v1165 = vadd.f32 0.0, %v1164
    %1166 = vmatprep.mubr.f32.mxu0 %v943
    %1167 = vmatmul.mubr.f32.gmra.mrb[0].mxu0 %v942
    %v1168 = vpop.f32.mrb[0].mxu0
    %v1169 = vadd.f32 0.0, %v1168
    %v1170 = vpop.f32.mrb[0].mxu0
    %v1171 = vadd.f32 0.0, %v1170
    %1172 = vmatprep.mubr.f32.mxu0 %v945
    %1173 = vmatmul.mubr.f32.gmra.mrb[0].mxu0 %v944
    %v1174 = vpop.f32.mrb[0].mxu0
    %v1175 = vadd.f32 0.0, %v1174
    %v1176 = vpop.f32.mrb[0].mxu0
    %v1177 = vadd.f32 0.0, %v1176
    %1178 = vmatprep.mubr.f32.mxu0 %v947
    %1179 = vmatmul.mubr.f32.gmra.mrb[0].mxu0 %v946
    %v1180 = vpop.f32.mrb[0].mxu0
    %v1181 = vadd.f32 0.0, %v1180
    %v1182 = vpop.f32.mrb[0].mxu0
    %v1183 = vadd.f32 0.0, %v1182
    %1184 = vmatprep.mubr.f32.mxu0 %v949
    %1185 = vmatmul.mubr.f32.gmra.mrb[0].mxu0 %v948
    %v1186 = vpop.f32.mrb[0].mxu0
    %v1187 = vadd.f32 0.0, %v1186
    %v1188 = vpop.f32.mrb[0].mxu0
    %v1189 = vadd.f32 0.0, %v1188
    %1190 = vmatprep.mubr.f32.mxu0 %v951
    %1191 = vmatmul.mubr.f32.gmra.mrb[0].mxu0 %v950
    %v1192 = vpop.f32.mrb[0].mxu0
    %v1193 = vadd.f32 0.0, %v1192
    %v1194 = vpop.f32.mrb[0].mxu0
    %v1195 = vadd.f32 0.0, %v1194
    %1196 = vmatprep.mubr.f32.mxu0 %v953
    %1197 = vmatmul.mubr.f32.gmra.mrb[0].mxu0 %v952
    %v1198 = vpop.f32.mrb[0].mxu0
    %v1199 = vadd.f32 0.0, %v1198
    %v1200 = vpop.f32.mrb[0].mxu0
    %v1201 = vadd.f32 0.0, %v1200
    %1202 = vmatprep.mubr.f32.mxu0 %v955
    %1203 = vmatmul.mubr.f32.gmra.mrb[0].mxu0 %v954
    %v1204 = vpop.f32.mrb[0].mxu0
    %v1205 = vadd.f32 0.0, %v1204
    %v1206 = vpop.f32.mrb[0].mxu0
    %v1207 = vadd.f32 0.0, %v1206
    %1208 = vmatprep.mubr.f32.mxu0 %v957
    %1209 = vmatmul.mubr.f32.gmra.mrb[0].mxu0 %v956
    %v1210 = vpop.f32.mrb[0].mxu0
    %v1211 = vadd.f32 0.0, %v1210
    %v1212 = vpop.f32.mrb[0].mxu0
    %v1213 = vadd.f32 0.0, %v1212
    %1214 = vmatprep.mubr.f32.mxu0 %v959
    %1215 = vmatmul.mubr.f32.gmra.mrb[0].mxu0 %v958
    %v1216 = vpop.f32.mrb[0].mxu0
    %v1217 = vadd.f32 0.0, %v1216
    %v1218 = vpop.f32.mrb[0].mxu0
    %v1219 = vadd.f32 0.0, %v1218
    %1220 = vmatprep.mubr.f32.mxu0 %v961
    %1221 = vmatmul.mubr.f32.gmra.mrb[0].mxu0 %v960
    %v1222 = vpop.f32.mrb[0].mxu0
    %v1223 = vadd.f32 0.0, %v1222
    %v1224 = vpop.f32.mrb[0].mxu0
    %v1225 = vadd.f32 0.0, %v1224
    %1226 = vmatprep.mubr.f32.mxu0 %v963
    %1227 = vmatmul.mubr.f32.gmra.mrb[0].mxu0 %v962
    %v1228 = vpop.f32.mrb[0].mxu0
    %v1229 = vadd.f32 0.0, %v1228
    %v1230 = vpop.f32.mrb[0].mxu0
    %v1231 = vadd.f32 0.0, %v1230
    %1232 = vmatprep.mubr.f32.mxu0 %v965
    %1233 = vmatmul.mubr.f32.gmra.mrb[0].mxu0 %v964
    %v1234 = vpop.f32.mrb[0].mxu0
    %v1235 = vadd.f32 0.0, %v1234
    %v1236 = vpop.f32.mrb[0].mxu0
    %v1237 = vadd.f32 0.0, %v1236
    %1238 = vmatprep.mubr.f32.mxu0 %v967
    %1239 = vmatmul.mubr.f32.gmra.mrb[0].mxu0 %v966
    %v1240 = vpop.f32.mrb[0].mxu0
    %v1241 = vadd.f32 0.0, %v1240
    %v1242 = vpop.f32.mrb[0].mxu0
    %v1243 = vadd.f32 0.0, %v1242
    %1244 = vmatprep.mubr.f32.mxu0 %v969
    %1245 = vmatmul.mubr.f32.gmra.mrb[0].mxu0 %v968
    %v1246 = vpop.f32.mrb[0].mxu0
    %v1247 = vadd.f32 0.0, %v1246
    %v1248 = vpop.f32.mrb[0].mxu0
    %v1249 = vadd.f32 0.0, %v1248
    %1250 = vmatprep.mubr.f32.mxu0 %v971
    %1251 = vmatmul.mubr.f32.gmra.mrb[0].mxu0 %v970
    %v1252 = vpop.f32.mrb[0].mxu0
    %v1253 = vadd.f32 0.0, %v1252
    %v1254 = vpop.f32.mrb[0].mxu0
    %v1255 = vadd.f32 0.0, %v1254
    %1256 = vmatprep.mubr.f32.mxu0 %v973
    %1257 = vmatmul.mubr.f32.gmra.mrb[0].mxu0 %v972
    %v1258 = vpop.f32.mrb[0].mxu0
    %v1259 = vadd.f32 0.0, %v1258
    %v1260 = vpop.f32.mrb[0].mxu0
    %v1261 = vadd.f32 0.0, %v1260
    %1262 = vmatprep.mubr.f32.mxu0 %v975
    %1263 = vmatmul.mubr.f32.gmra.mrb[0].mxu0 %v974
    %v1264 = vpop.f32.mrb[0].mxu0
    %v1265 = vadd.f32 0.0, %v1264
    %v1266 = vpop.f32.mrb[0].mxu0
    %v1267 = vadd.f32 0.0, %v1266
    %1268 = vmatprep.mubr.f32.mxu0 %v977
    %1269 = vmatmul.mubr.f32.gmra.mrb[0].mxu0 %v976
    %v1270 = vpop.f32.mrb[0].mxu0
    %v1271 = vadd.f32 0.0, %v1270
    %v1272 = vpop.f32.mrb[0].mxu0
    %v1273 = vadd.f32 0.0, %v1272
    %1274 = vmatprep.mubr.f32.mxu0 %v979
    %1275 = vmatmul.mubr.f32.gmra.mrb[0].mxu0 %v978
    %v1276 = vpop.f32.mrb[0].mxu0
    %v1277 = vadd.f32 0.0, %v1276
    %v1278 = vpop.f32.mrb[0].mxu0
    %v1279 = vadd.f32 0.0, %v1278
    %1280 = vmatprep.mubr.f32.mxu0 %v981
    %1281 = vmatmul.mubr.f32.gmra.mrb[0].mxu0 %v980
    %v1282 = vpop.f32.mrb[0].mxu0
    %v1283 = vadd.f32 0.0, %v1282
    %v1284 = vpop.f32.mrb[0].mxu0
    %v1285 = vadd.f32 0.0, %v1284
    %1286 = vmatprep.mubr.f32.mxu0 %v983
    %1287 = vmatmul.mubr.f32.gmra.mrb[0].mxu0 %v982
    %v1288 = vpop.f32.mrb[0].mxu0
    %v1289 = vadd.f32 0.0, %v1288
    %v1290 = vpop.f32.mrb[0].mxu0
    %v1291 = vadd.f32 0.0, %v1290
    %1292 = vmatprep.mubr.f32.mxu0 %v985
    %1293 = vmatmul.mubr.f32.gmra.mrb[0].mxu0 %v984
    %v1294 = vpop.f32.mrb[0].mxu0
    %v1295 = vadd.f32 0.0, %v1294
    %v1296 = vpop.f32.mrb[0].mxu0
    %v1297 = vadd.f32 0.0, %v1296
    %1298 = vmatprep.mubr.f32.mxu0 %v987
    %1299 = vmatmul.mubr.f32.gmra.mrb[0].mxu0 %v986
    %v1300 = vpop.f32.mrb[0].mxu0
    %v1301 = vadd.f32 0.0, %v1300
    %v1302 = vpop.f32.mrb[0].mxu0
    %v1303 = vadd.f32 0.0, %v1302
    %1304 = vmatprep.mubr.f32.mxu0 %v989
    %1305 = vmatmul.mubr.f32.gmra.mrb[0].mxu0 %v988
    %v1306 = vpop.f32.mrb[0].mxu0
    %v1307 = vadd.f32 0.0, %v1306
    %v1308 = vpop.f32.mrb[0].mxu0
    %v1309 = vadd.f32 0.0, %v1308
    %1310 = vdwg.mxu0
    %v1311 = vtanh.pop %v1121
    %v1312 = vtanh.pop %v1123
    %v1313 = vtanh.pop %v1127
    %v1314 = vtanh.pop %v1129
    %v1315 = vtanh.pop %v1133
    %v1316 = vtanh.pop %v1135
    %v1317 = vtanh.pop %v1139
    %v1318 = vtanh.pop %v1141
    %v1319 = vtanh.pop %v1145
    %v1320 = vtanh.pop %v1147
    %v1321 = vtanh.pop %v1151
    %v1322 = vtanh.pop %v1153
    %v1323 = vtanh.pop %v1157
    %v1324 = vtanh.pop %v1159
    %v1325 = vtanh.pop %v1163
    %v1326 = vtanh.pop %v1165
    %v1327 = vtanh.pop %v1169
    %v1328 = vtanh.pop %v1171
    %v1329 = vtanh.pop %v1175
    %v1330 = vtanh.pop %v1177
    %v1331 = vtanh.pop %v1181
    %v1332 = vtanh.pop %v1183
    %v1333 = vtanh.pop %v1187
    %v1334 = vtanh.pop %v1189
    %v1335 = vtanh.pop %v1193
    %v1336 = vtanh.pop %v1195
    %v1337 = vtanh.pop %v1199
    %v1338 = vtanh.pop %v1201
    %v1339 = vtanh.pop %v1205
    %v1340 = vtanh.pop %v1207
    %v1341 = vtanh.pop %v1211
    %v1342 = vtanh.pop %v1213
    %v1343 = vtanh.pop %v1217
    %v1344 = vtanh.pop %v1219
    %v1345 = vtanh.pop %v1223
    %v1346 = vtanh.pop %v1225
    %v1347 = vtanh.pop %v1229
    %v1348 = vtanh.pop %v1231
    %v1349 = vtanh.pop %v1235
    %v1350 = vtanh.pop %v1237
    %v1351 = vtanh.pop %v1241
    %v1352 = vtanh.pop %v1243
    %v1353 = vtanh.pop %v1247
    %v1354 = vtanh.pop %v1249
    %v1355 = vtanh.pop %v1253
    %v1356 = vtanh.pop %v1255
    %v1357 = vtanh.pop %v1259
    %v1358 = vtanh.pop %v1261
    %v1359 = vtanh.pop %v1265
    %v1360 = vtanh.pop %v1267
    %v1361 = vtanh.pop %v1271
    %v1362 = vtanh.pop %v1273
    %v1363 = vtanh.pop %v1277
    %v1364 = vtanh.pop %v1279
    %v1365 = vtanh.pop %v1283
    %v1366 = vtanh.pop %v1285
    %v1367 = vtanh.pop %v1289
    %v1368 = vtanh.pop %v1291
    %v1369 = vtanh.pop %v1295
    %v1370 = vtanh.pop %v1297
    %v1371 = vtanh.pop %v1301
    %v1372 = vtanh.pop %v1303
    %v1373 = vtanh.pop %v1307
    %v1374 = vtanh.pop %v1309
    %v1375 = vld [vmem:[%s4] sm:$0x3]
    %v1377 = vlaneseq
    %v1378 = vshrl.u32 %v1377, 7
    %v1379 = vsub.s32 0, %v1378
    %v1380 = vrot.slane %v1375, %v1379
    %v1381 = vlaneseq
    %v1382 = vshrl.u32 %v1381, 7
    %v1383 = vsub.s32 1, %v1382
    %v1384 = vrot.slane %v1375, %v1383
    %v1387 = vmul.f32 %v1311, %v1380
    %v1388 = vmul.f32 %v1312, %v1384
    %v1389 = vmul.f32 %v1313, %v1380
    %v1390 = vmul.f32 %v1314, %v1384
    %v1391 = vmul.f32 %v1315, %v1380
    %v1392 = vmul.f32 %v1316, %v1384
    %v1393 = vmul.f32 %v1317, %v1380
    %v1394 = vmul.f32 %v1318, %v1384
    %v1395 = vmul.f32 %v1319, %v1380
    %v1396 = vmul.f32 %v1320, %v1384
    %v1397 = vmul.f32 %v1321, %v1380
    %v1398 = vmul.f32 %v1322, %v1384
    %v1399 = vmul.f32 %v1323, %v1380
    %v1400 = vmul.f32 %v1324, %v1384
    %v1401 = vmul.f32 %v1325, %v1380
    %v1402 = vmul.f32 %v1326, %v1384
    %v1403 = vmul.f32 %v1327, %v1380
    %v1404 = vmul.f32 %v1328, %v1384
    %v1405 = vmul.f32 %v1329, %v1380
    %v1406 = vmul.f32 %v1330, %v1384
    %v1407 = vmul.f32 %v1331, %v1380
    %v1408 = vmul.f32 %v1332, %v1384
    %v1409 = vmul.f32 %v1333, %v1380
    %v1410 = vmul.f32 %v1334, %v1384
    %v1411 = vmul.f32 %v1335, %v1380
    %v1412 = vmul.f32 %v1336, %v1384
    %v1413 = vmul.f32 %v1337, %v1380
    %v1414 = vmul.f32 %v1338, %v1384
    %v1415 = vmul.f32 %v1339, %v1380
    %v1416 = vmul.f32 %v1340, %v1384
    %v1417 = vmul.f32 %v1341, %v1380
    %v1418 = vmul.f32 %v1342, %v1384
    %v1419 = vmul.f32 %v1343, %v1380
    %v1420 = vmul.f32 %v1344, %v1384
    %v1421 = vmul.f32 %v1345, %v1380
    %v1422 = vmul.f32 %v1346, %v1384
    %v1423 = vmul.f32 %v1347, %v1380
    %v1424 = vmul.f32 %v1348, %v1384
    %v1425 = vmul.f32 %v1349, %v1380
    %v1426 = vmul.f32 %v1350, %v1384
    %v1427 = vmul.f32 %v1351, %v1380
    %v1428 = vmul.f32 %v1352, %v1384
    %v1429 = vmul.f32 %v1353, %v1380
    %v1430 = vmul.f32 %v1354, %v1384
    %v1431 = vmul.f32 %v1355, %v1380
    %v1432 = vmul.f32 %v1356, %v1384
    %v1433 = vmul.f32 %v1357, %v1380
    %v1434 = vmul.f32 %v1358, %v1384
    %v1435 = vmul.f32 %v1359, %v1380
    %v1436 = vmul.f32 %v1360, %v1384
    %v1437 = vmul.f32 %v1361, %v1380
    %v1438 = vmul.f32 %v1362, %v1384
    %v1439 = vmul.f32 %v1363, %v1380
    %v1440 = vmul.f32 %v1364, %v1384
    %v1441 = vmul.f32 %v1365, %v1380
    %v1442 = vmul.f32 %v1366, %v1384
    %v1443 = vmul.f32 %v1367, %v1380
    %v1444 = vmul.f32 %v1368, %v1384
    %v1445 = vmul.f32 %v1369, %v1380
    %v1446 = vmul.f32 %v1370, %v1384
    %v1447 = vmul.f32 %v1371, %v1380
    %v1448 = vmul.f32 %v1372, %v1384
    %v1449 = vmul.f32 %v1373, %v1380
    %v1450 = vmul.f32 %v1374, %v1384
    %v1451 = vadd.f32 %v1387, %v1388
    %1452 = vadd.xlane.f32.xlu0 %v1451
    %v1453 = vpop.xlane.xlu0 %1452
    %v1454 = vadd.f32 %v1389, %v1390
    %1455 = vadd.xlane.f32.xlu0 %v1454
    %v1456 = vpop.xlane.xlu0 %1455
    %v1457 = vadd.f32 %v1391, %v1392
    %1458 = vadd.xlane.f32.xlu0 %v1457
    %v1459 = vpop.xlane.xlu0 %1458
    %v1460 = vadd.f32 %v1393, %v1394
    %1461 = vadd.xlane.f32.xlu0 %v1460
    %v1462 = vpop.xlane.xlu0 %1461
    %v1463 = vadd.f32 %v1395, %v1396
    %1464 = vadd.xlane.f32.xlu0 %v1463
    %v1465 = vpop.xlane.xlu0 %1464
    %v1466 = vadd.f32 %v1397, %v1398
    %1467 = vadd.xlane.f32.xlu0 %v1466
    %v1468 = vpop.xlane.xlu0 %1467
    %v1469 = vadd.f32 %v1399, %v1400
    %1470 = vadd.xlane.f32.xlu0 %v1469
    %v1471 = vpop.xlane.xlu0 %1470
    %v1472 = vadd.f32 %v1401, %v1402
    %1473 = vadd.xlane.f32.xlu0 %v1472
    %v1474 = vpop.xlane.xlu0 %1473
    %v1475 = vadd.f32 %v1403, %v1404
    %1476 = vadd.xlane.f32.xlu0 %v1475
    %v1477 = vpop.xlane.xlu0 %1476
    %v1478 = vadd.f32 %v1405, %v1406
    %1479 = vadd.xlane.f32.xlu0 %v1478
    %v1480 = vpop.xlane.xlu0 %1479
    %v1481 = vadd.f32 %v1407, %v1408
    %1482 = vadd.xlane.f32.xlu0 %v1481
    %v1483 = vpop.xlane.xlu0 %1482
    %v1484 = vadd.f32 %v1409, %v1410
    %1485 = vadd.xlane.f32.xlu0 %v1484
    %v1486 = vpop.xlane.xlu0 %1485
    %v1487 = vadd.f32 %v1411, %v1412
    %1488 = vadd.xlane.f32.xlu0 %v1487
    %v1489 = vpop.xlane.xlu0 %1488
    %v1490 = vadd.f32 %v1413, %v1414
    %1491 = vadd.xlane.f32.xlu0 %v1490
    %v1492 = vpop.xlane.xlu0 %1491
    %v1493 = vadd.f32 %v1415, %v1416
    %1494 = vadd.xlane.f32.xlu0 %v1493
    %v1495 = vpop.xlane.xlu0 %1494
    %v1496 = vadd.f32 %v1417, %v1418
    %1497 = vadd.xlane.f32.xlu0 %v1496
    %v1498 = vpop.xlane.xlu0 %1497
    %v1499 = vadd.f32 %v1419, %v1420
    %1500 = vadd.xlane.f32.xlu0 %v1499
    %v1501 = vpop.xlane.xlu0 %1500
    %v1502 = vadd.f32 %v1421, %v1422
    %1503 = vadd.xlane.f32.xlu0 %v1502
    %v1504 = vpop.xlane.xlu0 %1503
    %v1505 = vadd.f32 %v1423, %v1424
    %1506 = vadd.xlane.f32.xlu0 %v1505
    %v1507 = vpop.xlane.xlu0 %1506
    %v1508 = vadd.f32 %v1425, %v1426
    %1509 = vadd.xlane.f32.xlu0 %v1508
    %v1510 = vpop.xlane.xlu0 %1509
    %v1511 = vadd.f32 %v1427, %v1428
    %1512 = vadd.xlane.f32.xlu0 %v1511
    %v1513 = vpop.xlane.xlu0 %1512
    %v1514 = vadd.f32 %v1429, %v1430
    %1515 = vadd.xlane.f32.xlu0 %v1514
    %v1516 = vpop.xlane.xlu0 %1515
    %v1517 = vadd.f32 %v1431, %v1432
    %1518 = vadd.xlane.f32.xlu0 %v1517
    %v1519 = vpop.xlane.xlu0 %1518
    %v1520 = vadd.f32 %v1433, %v1434
    %1521 = vadd.xlane.f32.xlu0 %v1520
    %v1522 = vpop.xlane.xlu0 %1521
    %v1523 = vadd.f32 %v1435, %v1436
    %1524 = vadd.xlane.f32.xlu0 %v1523
    %v1525 = vpop.xlane.xlu0 %1524
    %v1526 = vadd.f32 %v1437, %v1438
    %1527 = vadd.xlane.f32.xlu0 %v1526
    %v1528 = vpop.xlane.xlu0 %1527
    %v1529 = vadd.f32 %v1439, %v1440
    %1530 = vadd.xlane.f32.xlu0 %v1529
    %v1531 = vpop.xlane.xlu0 %1530
    %v1532 = vadd.f32 %v1441, %v1442
    %1533 = vadd.xlane.f32.xlu0 %v1532
    %v1534 = vpop.xlane.xlu0 %1533
    %v1535 = vadd.f32 %v1443, %v1444
    %1536 = vadd.xlane.f32.xlu0 %v1535
    %v1537 = vpop.xlane.xlu0 %1536
    %v1538 = vadd.f32 %v1445, %v1446
    %1539 = vadd.xlane.f32.xlu0 %v1538
    %v1540 = vpop.xlane.xlu0 %1539
    %v1541 = vadd.f32 %v1447, %v1448
    %1542 = vadd.xlane.f32.xlu0 %v1541
    %v1543 = vpop.xlane.xlu0 %1542
    %v1544 = vadd.f32 %v1449, %v1450
    %1545 = vadd.xlane.f32.xlu0 %v1544
    %v1546 = vpop.xlane.xlu0 %1545
    %v1579 = vlaneseq
    %v1580 = vand.u32 %v1579, 127
    %v1581 = vlaneseq
    %v1582 = vshrl.u32 %v1581, 7
    %v1583 = vsub.s32 %v1580, %v1582
    %v1584 = vrot.slane %v1453, %v1583
    %v1585 = vadd.s32 %v1580, 4294967288
    %v1586 = vlaneseq
    %v1587 = vshrl.u32 %v1586, 7
    %v1588 = vsub.s32 %v1585, %v1587
    %v1589 = vrot.slane %v1456, %v1588
    %vm1590 = vcmask 130112
    %v1591 = vsel %vm1590, %v1589, %v1584
    %v1592 = vlaneseq
    %v1593 = vshrl.u32 %v1592, 7
    %v1594 = vsub.s32 %v1580, %v1593
    %v1595 = vrot.slane %v1459, %v1594
    %v1596 = vlaneseq
    %v1597 = vshrl.u32 %v1596, 7
    %v1598 = vsub.s32 %v1585, %v1597
    %v1599 = vrot.slane %v1462, %v1598
    %v1600 = vsel %vm1590, %v1599, %v1595
    %v1601 = vlaneseq
    %v1602 = vshrl.u32 %v1601, 7
    %v1603 = vsub.s32 %v1580, %v1602
    %v1604 = vrot.slane %v1465, %v1603
    %v1605 = vlaneseq
    %v1606 = vshrl.u32 %v1605, 7
    %v1607 = vsub.s32 %v1585, %v1606
    %v1608 = vrot.slane %v1468, %v1607
    %v1609 = vsel %vm1590, %v1608, %v1604
    %v1610 = vlaneseq
    %v1611 = vshrl.u32 %v1610, 7
    %v1612 = vsub.s32 %v1580, %v1611
    %v1613 = vrot.slane %v1471, %v1612
    %v1614 = vlaneseq
    %v1615 = vshrl.u32 %v1614, 7
    %v1616 = vsub.s32 %v1585, %v1615
    %v1617 = vrot.slane %v1474, %v1616
    %v1618 = vsel %vm1590, %v1617, %v1613
    %v1619 = vlaneseq
    %v1620 = vshrl.u32 %v1619, 7
    %v1621 = vsub.s32 %v1580, %v1620
    %v1622 = vrot.slane %v1477, %v1621
    %v1623 = vlaneseq
    %v1624 = vshrl.u32 %v1623, 7
    %v1625 = vsub.s32 %v1585, %v1624
    %v1626 = vrot.slane %v1480, %v1625
    %v1627 = vsel %vm1590, %v1626, %v1622
    %v1628 = vlaneseq
    %v1629 = vshrl.u32 %v1628, 7
    %v1630 = vsub.s32 %v1580, %v1629
    %v1631 = vrot.slane %v1483, %v1630
    %v1632 = vlaneseq
    %v1633 = vshrl.u32 %v1632, 7
    %v1634 = vsub.s32 %v1585, %v1633
    %v1635 = vrot.slane %v1486, %v1634
    %v1636 = vsel %vm1590, %v1635, %v1631
    %v1637 = vlaneseq
    %v1638 = vshrl.u32 %v1637, 7
    %v1639 = vsub.s32 %v1580, %v1638
    %v1640 = vrot.slane %v1489, %v1639
    %v1641 = vlaneseq
    %v1642 = vshrl.u32 %v1641, 7
    %v1643 = vsub.s32 %v1585, %v1642
    %v1644 = vrot.slane %v1492, %v1643
    %v1645 = vsel %vm1590, %v1644, %v1640
    %v1646 = vlaneseq
    %v1647 = vshrl.u32 %v1646, 7
    %v1648 = vsub.s32 %v1580, %v1647
    %v1649 = vrot.slane %v1495, %v1648
    %v1650 = vlaneseq
    %v1651 = vshrl.u32 %v1650, 7
    %v1652 = vsub.s32 %v1585, %v1651
    %v1653 = vrot.slane %v1498, %v1652
    %v1654 = vsel %vm1590, %v1653, %v1649
    %v1655 = vlaneseq
    %v1656 = vshrl.u32 %v1655, 7
    %v1657 = vsub.s32 %v1580, %v1656
    %v1658 = vrot.slane %v1501, %v1657
    %v1659 = vlaneseq
    %v1660 = vshrl.u32 %v1659, 7
    %v1661 = vsub.s32 %v1585, %v1660
    %v1662 = vrot.slane %v1504, %v1661
    %v1663 = vsel %vm1590, %v1662, %v1658
    %v1664 = vlaneseq
    %v1665 = vshrl.u32 %v1664, 7
    %v1666 = vsub.s32 %v1580, %v1665
    %v1667 = vrot.slane %v1507, %v1666
    %v1668 = vlaneseq
    %v1669 = vshrl.u32 %v1668, 7
    %v1670 = vsub.s32 %v1585, %v1669
    %v1671 = vrot.slane %v1510, %v1670
    %v1672 = vsel %vm1590, %v1671, %v1667
    %v1673 = vlaneseq
    %v1674 = vshrl.u32 %v1673, 7
    %v1675 = vsub.s32 %v1580, %v1674
    %v1676 = vrot.slane %v1513, %v1675
    %v1677 = vlaneseq
    %v1678 = vshrl.u32 %v1677, 7
    %v1679 = vsub.s32 %v1585, %v1678
    %v1680 = vrot.slane %v1516, %v1679
    %v1681 = vsel %vm1590, %v1680, %v1676
    %v1682 = vlaneseq
    %v1683 = vshrl.u32 %v1682, 7
    %v1684 = vsub.s32 %v1580, %v1683
    %v1685 = vrot.slane %v1519, %v1684
    %v1686 = vlaneseq
    %v1687 = vshrl.u32 %v1686, 7
    %v1688 = vsub.s32 %v1585, %v1687
    %v1689 = vrot.slane %v1522, %v1688
    %v1690 = vsel %vm1590, %v1689, %v1685
    %v1691 = vlaneseq
    %v1692 = vshrl.u32 %v1691, 7
    %v1693 = vsub.s32 %v1580, %v1692
    %v1694 = vrot.slane %v1525, %v1693
    %v1695 = vlaneseq
    %v1696 = vshrl.u32 %v1695, 7
    %v1697 = vsub.s32 %v1585, %v1696
    %v1698 = vrot.slane %v1528, %v1697
    %v1699 = vsel %vm1590, %v1698, %v1694
    %v1700 = vlaneseq
    %v1701 = vshrl.u32 %v1700, 7
    %v1702 = vsub.s32 %v1580, %v1701
    %v1703 = vrot.slane %v1531, %v1702
    %v1704 = vlaneseq
    %v1705 = vshrl.u32 %v1704, 7
    %v1706 = vsub.s32 %v1585, %v1705
    %v1707 = vrot.slane %v1534, %v1706
    %v1708 = vsel %vm1590, %v1707, %v1703
    %v1709 = vlaneseq
    %v1710 = vshrl.u32 %v1709, 7
    %v1711 = vsub.s32 %v1580, %v1710
    %v1712 = vrot.slane %v1537, %v1711
    %v1713 = vlaneseq
    %v1714 = vshrl.u32 %v1713, 7
    %v1715 = vsub.s32 %v1585, %v1714
    %v1716 = vrot.slane %v1540, %v1715
    %v1717 = vsel %vm1590, %v1716, %v1712
    %v1718 = vlaneseq
    %v1719 = vshrl.u32 %v1718, 7
    %v1720 = vsub.s32 %v1580, %v1719
    %v1721 = vrot.slane %v1543, %v1720
    %v1722 = vlaneseq
    %v1723 = vshrl.u32 %v1722, 7
    %v1724 = vsub.s32 %v1585, %v1723
    %v1725 = vrot.slane %v1546, %v1724
    %v1726 = vsel %vm1590, %v1725, %v1721
    %vm1727 = vcmask 1041409
    %v1728 = vsel %vm1727, %v1600, %v1591
    %vm1729 = vcmask 1042434
    %v1730 = vsel %vm1729, %v1609, %v1728
    %vm1731 = vcmask 1043459
    %v1732 = vsel %vm1731, %v1618, %v1730
    %vm1733 = vcmask 1044484
    %v1734 = vsel %vm1733, %v1627, %v1732
    %vm1735 = vcmask 1045509
    %v1736 = vsel %vm1735, %v1636, %v1734
    %vm1737 = vcmask 1046534
    %v1738 = vsel %vm1737, %v1645, %v1736
    %vm1739 = vcmask 1047559
    %v1740 = vsel %vm1739, %v1654, %v1738
    %v1741 = vsel %vm1727, %v1672, %v1663
    %v1742 = vsel %vm1729, %v1681, %v1741
    %v1743 = vsel %vm1731, %v1690, %v1742
    %v1744 = vsel %vm1733, %v1699, %v1743
    %v1745 = vsel %vm1735, %v1708, %v1744
    %v1746 = vsel %vm1737, %v1717, %v1745
    %v1747 = vsel %vm1739, %v1726, %v1746
    %vm1750 = vcmask 130048
    %v1751 = vsel %vm1750, %v1740, -inf
    %1752 = vmax.xlane.f32.xlu0 %v1751
    %v1753 = vpop.xlane.xlu0 %1752
    %v1754 = vsel %vm1750, %v1747, -inf
    %1755 = vmax.xlane.f32.xlu0 %v1754
    %v1756 = vpop.xlane.xlu0 %1755
    %v1759 = vlaneseq
    %v1760 = vshrl.u32 %v1759, 7
    %v1761 = vsub.s32 0, %v1760
    %v1762 = vrot.slane %v1753, %v1761
    %v1763 = vlaneseq
    %v1764 = vshrl.u32 %v1763, 7
    %v1765 = vsub.s32 1, %v1764
    %v1766 = vrot.slane %v1753, %v1765
    %v1767 = vlaneseq
    %v1768 = vshrl.u32 %v1767, 7
    %v1769 = vsub.s32 2, %v1768
    %v1770 = vrot.slane %v1753, %v1769
    %v1771 = vlaneseq
    %v1772 = vshrl.u32 %v1771, 7
    %v1773 = vsub.s32 3, %v1772
    %v1774 = vrot.slane %v1753, %v1773
    %v1775 = vlaneseq
    %v1776 = vshrl.u32 %v1775, 7
    %v1777 = vsub.s32 4, %v1776
    %v1778 = vrot.slane %v1753, %v1777
    %v1779 = vlaneseq
    %v1780 = vshrl.u32 %v1779, 7
    %v1781 = vsub.s32 5, %v1780
    %v1782 = vrot.slane %v1753, %v1781
    %v1783 = vlaneseq
    %v1784 = vshrl.u32 %v1783, 7
    %v1785 = vsub.s32 6, %v1784
    %v1786 = vrot.slane %v1753, %v1785
    %v1787 = vlaneseq
    %v1788 = vshrl.u32 %v1787, 7
    %v1789 = vsub.s32 7, %v1788
    %v1790 = vrot.slane %v1753, %v1789
    %v1791 = vlaneseq
    %v1792 = vshrl.u32 %v1791, 7
    %v1793 = vsub.s32 0, %v1792
    %v1794 = vrot.slane %v1756, %v1793
    %v1795 = vlaneseq
    %v1796 = vshrl.u32 %v1795, 7
    %v1797 = vsub.s32 1, %v1796
    %v1798 = vrot.slane %v1756, %v1797
    %v1799 = vlaneseq
    %v1800 = vshrl.u32 %v1799, 7
    %v1801 = vsub.s32 2, %v1800
    %v1802 = vrot.slane %v1756, %v1801
    %v1803 = vlaneseq
    %v1804 = vshrl.u32 %v1803, 7
    %v1805 = vsub.s32 3, %v1804
    %v1806 = vrot.slane %v1756, %v1805
    %v1807 = vlaneseq
    %v1808 = vshrl.u32 %v1807, 7
    %v1809 = vsub.s32 4, %v1808
    %v1810 = vrot.slane %v1756, %v1809
    %v1811 = vlaneseq
    %v1812 = vshrl.u32 %v1811, 7
    %v1813 = vsub.s32 5, %v1812
    %v1814 = vrot.slane %v1756, %v1813
    %v1815 = vlaneseq
    %v1816 = vshrl.u32 %v1815, 7
    %v1817 = vsub.s32 6, %v1816
    %v1818 = vrot.slane %v1756, %v1817
    %v1819 = vlaneseq
    %v1820 = vshrl.u32 %v1819, 7
    %v1821 = vsub.s32 7, %v1820
    %v1822 = vrot.slane %v1756, %v1821
    %v1839 = vsub.f32 %v1453, %v1762
    %v1840 = vsub.f32 %v1456, %v1762
    %v1841 = vsub.f32 %v1459, %v1766
    %v1842 = vsub.f32 %v1462, %v1766
    %v1843 = vsub.f32 %v1465, %v1770
    %v1844 = vsub.f32 %v1468, %v1770
    %v1845 = vsub.f32 %v1471, %v1774
    %v1846 = vsub.f32 %v1474, %v1774
    %v1847 = vsub.f32 %v1477, %v1778
    %v1848 = vsub.f32 %v1480, %v1778
    %v1849 = vsub.f32 %v1483, %v1782
    %v1850 = vsub.f32 %v1486, %v1782
    %v1851 = vsub.f32 %v1489, %v1786
    %v1852 = vsub.f32 %v1492, %v1786
    %v1853 = vsub.f32 %v1495, %v1790
    %v1854 = vsub.f32 %v1498, %v1790
    %v1855 = vsub.f32 %v1501, %v1794
    %v1856 = vsub.f32 %v1504, %v1794
    %v1857 = vsub.f32 %v1507, %v1798
    %v1858 = vsub.f32 %v1510, %v1798
    %v1859 = vsub.f32 %v1513, %v1802
    %v1860 = vsub.f32 %v1516, %v1802
    %v1861 = vsub.f32 %v1519, %v1806
    %v1862 = vsub.f32 %v1522, %v1806
    %v1863 = vsub.f32 %v1525, %v1810
    %v1864 = vsub.f32 %v1528, %v1810
    %v1865 = vsub.f32 %v1531, %v1814
    %v1866 = vsub.f32 %v1534, %v1814
    %v1867 = vsub.f32 %v1537, %v1818
    %v1868 = vsub.f32 %v1540, %v1818
    %v1869 = vsub.f32 %v1543, %v1822
    %v1870 = vsub.f32 %v1546, %v1822
    %v1871 = vmul.f32 %v1839, 1.442695
    %v1872 = vpow.pop %v1871
    %v1873 = vmul.f32 %v1840, 1.442695
    %v1874 = vpow.pop %v1873
    %v1875 = vmul.f32 %v1841, 1.442695
    %v1876 = vpow.pop %v1875
    %v1877 = vmul.f32 %v1842, 1.442695
    %v1878 = vpow.pop %v1877
    %v1879 = vmul.f32 %v1843, 1.442695
    %v1880 = vpow.pop %v1879
    %v1881 = vmul.f32 %v1844, 1.442695
    %v1882 = vpow.pop %v1881
    %v1883 = vmul.f32 %v1845, 1.442695
    %v1884 = vpow.pop %v1883
    %v1885 = vmul.f32 %v1846, 1.442695
    %v1886 = vpow.pop %v1885
    %v1887 = vmul.f32 %v1847, 1.442695
    %v1888 = vpow.pop %v1887
    %v1889 = vmul.f32 %v1848, 1.442695
    %v1890 = vpow.pop %v1889
    %v1891 = vmul.f32 %v1849, 1.442695
    %v1892 = vpow.pop %v1891
    %v1893 = vmul.f32 %v1850, 1.442695
    %v1894 = vpow.pop %v1893
    %v1895 = vmul.f32 %v1851, 1.442695
    %v1896 = vpow.pop %v1895
    %v1897 = vmul.f32 %v1852, 1.442695
    %v1898 = vpow.pop %v1897
    %v1899 = vmul.f32 %v1853, 1.442695
    %v1900 = vpow.pop %v1899
    %v1901 = vmul.f32 %v1854, 1.442695
    %v1902 = vpow.pop %v1901
    %v1903 = vmul.f32 %v1855, 1.442695
    %v1904 = vpow.pop %v1903
    %v1905 = vmul.f32 %v1856, 1.442695
    %v1906 = vpow.pop %v1905
    %v1907 = vmul.f32 %v1857, 1.442695
    %v1908 = vpow.pop %v1907
    %v1909 = vmul.f32 %v1858, 1.442695
    %v1910 = vpow.pop %v1909
    %v1911 = vmul.f32 %v1859, 1.442695
    %v1912 = vpow.pop %v1911
    %v1913 = vmul.f32 %v1860, 1.442695
    %v1914 = vpow.pop %v1913
    %v1915 = vmul.f32 %v1861, 1.442695
    %v1916 = vpow.pop %v1915
    %v1917 = vmul.f32 %v1862, 1.442695
    %v1918 = vpow.pop %v1917
    %v1919 = vmul.f32 %v1863, 1.442695
    %v1920 = vpow.pop %v1919
    %v1921 = vmul.f32 %v1864, 1.442695
    %v1922 = vpow.pop %v1921
    %v1923 = vmul.f32 %v1865, 1.442695
    %v1924 = vpow.pop %v1923
    %v1925 = vmul.f32 %v1866, 1.442695
    %v1926 = vpow.pop %v1925
    %v1927 = vmul.f32 %v1867, 1.442695
    %v1928 = vpow.pop %v1927
    %v1929 = vmul.f32 %v1868, 1.442695
    %v1930 = vpow.pop %v1929
    %v1931 = vmul.f32 %v1869, 1.442695
    %v1932 = vpow.pop %v1931
    %v1933 = vmul.f32 %v1870, 1.442695
    %v1934 = vpow.pop %v1933
    %1967 = vset.pattern.permute.xlu0 0
    %1968 = vperm.xlu0 %1967, %v1872
    %v1969 = vpop.permute.xlu0 %1968
    %1970 = vset.pattern.permute.xlu0 0
    %1971 = vperm.xlu0 %1970, %v1874
    %v1972 = vpop.permute.xlu0 %1971
    %1973 = vset.pattern.permute.xlu0 0
    %1974 = vperm.xlu0 %1973, %v1876
    %v1975 = vpop.permute.xlu0 %1974
    %1976 = vset.pattern.permute.xlu0 0
    %1977 = vperm.xlu0 %1976, %v1878
    %v1978 = vpop.permute.xlu0 %1977
    %1979 = vset.pattern.permute.xlu0 0
    %1980 = vperm.xlu0 %1979, %v1880
    %v1981 = vpop.permute.xlu0 %1980
    %1982 = vset.pattern.permute.xlu0 0
    %1983 = vperm.xlu0 %1982, %v1882
    %v1984 = vpop.permute.xlu0 %1983
    %1985 = vset.pattern.permute.xlu0 0
    %1986 = vperm.xlu0 %1985, %v1884
    %v1987 = vpop.permute.xlu0 %1986
    %1988 = vset.pattern.permute.xlu0 0
    %1989 = vperm.xlu0 %1988, %v1886
    %v1990 = vpop.permute.xlu0 %1989
    %1991 = vset.pattern.permute.xlu0 0
    %1992 = vperm.xlu0 %1991, %v1888
    %v1993 = vpop.permute.xlu0 %1992
    %1994 = vset.pattern.permute.xlu0 0
    %1995 = vperm.xlu0 %1994, %v1890
    %v1996 = vpop.permute.xlu0 %1995
    %1997 = vset.pattern.permute.xlu0 0
    %1998 = vperm.xlu0 %1997, %v1892
    %v1999 = vpop.permute.xlu0 %1998
    %2000 = vset.pattern.permute.xlu0 0
    %2001 = vperm.xlu0 %2000, %v1894
    %v2002 = vpop.permute.xlu0 %2001
    %2003 = vset.pattern.permute.xlu0 0
    %2004 = vperm.xlu0 %2003, %v1896
    %v2005 = vpop.permute.xlu0 %2004
    %2006 = vset.pattern.permute.xlu0 0
    %2007 = vperm.xlu0 %2006, %v1898
    %v2008 = vpop.permute.xlu0 %2007
    %2009 = vset.pattern.permute.xlu0 0
    %2010 = vperm.xlu0 %2009, %v1900
    %v2011 = vpop.permute.xlu0 %2010
    %2012 = vset.pattern.permute.xlu0 0
    %2013 = vperm.xlu0 %2012, %v1902
    %v2014 = vpop.permute.xlu0 %2013
    %2015 = vset.pattern.permute.xlu0 0
    %2016 = vperm.xlu0 %2015, %v1904
    %v2017 = vpop.permute.xlu0 %2016
    %2018 = vset.pattern.permute.xlu0 0
    %2019 = vperm.xlu0 %2018, %v1906
    %v2020 = vpop.permute.xlu0 %2019
    %2021 = vset.pattern.permute.xlu0 0
    %2022 = vperm.xlu0 %2021, %v1908
    %v2023 = vpop.permute.xlu0 %2022
    %2024 = vset.pattern.permute.xlu0 0
    %2025 = vperm.xlu0 %2024, %v1910
    %v2026 = vpop.permute.xlu0 %2025
    %2027 = vset.pattern.permute.xlu0 0
    %2028 = vperm.xlu0 %2027, %v1912
    %v2029 = vpop.permute.xlu0 %2028
    %2030 = vset.pattern.permute.xlu0 0
    %2031 = vperm.xlu0 %2030, %v1914
    %v2032 = vpop.permute.xlu0 %2031
    %2033 = vset.pattern.permute.xlu0 0
    %2034 = vperm.xlu0 %2033, %v1916
    %v2035 = vpop.permute.xlu0 %2034
    %2036 = vset.pattern.permute.xlu0 0
    %2037 = vperm.xlu0 %2036, %v1918
    %v2038 = vpop.permute.xlu0 %2037
    %2039 = vset.pattern.permute.xlu0 0
    %2040 = vperm.xlu0 %2039, %v1920
    %v2041 = vpop.permute.xlu0 %2040
    %2042 = vset.pattern.permute.xlu0 0
    %2043 = vperm.xlu0 %2042, %v1922
    %v2044 = vpop.permute.xlu0 %2043
    %2045 = vset.pattern.permute.xlu0 0
    %2046 = vperm.xlu0 %2045, %v1924
    %v2047 = vpop.permute.xlu0 %2046
    %2048 = vset.pattern.permute.xlu0 0
    %2049 = vperm.xlu0 %2048, %v1926
    %v2050 = vpop.permute.xlu0 %2049
    %2051 = vset.pattern.permute.xlu0 0
    %2052 = vperm.xlu0 %2051, %v1928
    %v2053 = vpop.permute.xlu0 %2052
    %2054 = vset.pattern.permute.xlu0 0
    %2055 = vperm.xlu0 %2054, %v1930
    %v2056 = vpop.permute.xlu0 %2055
    %2057 = vset.pattern.permute.xlu0 0
    %2058 = vperm.xlu0 %2057, %v1932
    %v2059 = vpop.permute.xlu0 %2058
    %2060 = vset.pattern.permute.xlu0 0
    %2061 = vperm.xlu0 %2060, %v1934
    %v2062 = vpop.permute.xlu0 %2061
    %v2063 = vlaneseq
    %v2064 = vshrl.u32 %v2063, 7
    %v2065 = vsub.s32 %v1580, %v2064
    %v2066 = vrot.slane %v1969, %v2065
    %v2067 = vlaneseq
    %v2068 = vshrl.u32 %v2067, 7
    %v2069 = vsub.s32 %v1585, %v2068
    %v2070 = vrot.slane %v1972, %v2069
    %v2071 = vsel %vm1590, %v2070, %v2066
    %v2072 = vlaneseq
    %v2073 = vshrl.u32 %v2072, 7
    %v2074 = vsub.s32 %v1580, %v2073
    %v2075 = vrot.slane %v1975, %v2074
    %v2076 = vlaneseq
    %v2077 = vshrl.u32 %v2076, 7
    %v2078 = vsub.s32 %v1585, %v2077
    %v2079 = vrot.slane %v1978, %v2078
    %v2080 = vsel %vm1590, %v2079, %v2075
    %v2081 = vlaneseq
    %v2082 = vshrl.u32 %v2081, 7
    %v2083 = vsub.s32 %v1580, %v2082
    %v2084 = vrot.slane %v1981, %v2083
    %v2085 = vlaneseq
    %v2086 = vshrl.u32 %v2085, 7
    %v2087 = vsub.s32 %v1585, %v2086
    %v2088 = vrot.slane %v1984, %v2087
    %v2089 = vsel %vm1590, %v2088, %v2084
    %v2090 = vlaneseq
    %v2091 = vshrl.u32 %v2090, 7
    %v2092 = vsub.s32 %v1580, %v2091
    %v2093 = vrot.slane %v1987, %v2092
    %v2094 = vlaneseq
    %v2095 = vshrl.u32 %v2094, 7
    %v2096 = vsub.s32 %v1585, %v2095
    %v2097 = vrot.slane %v1990, %v2096
    %v2098 = vsel %vm1590, %v2097, %v2093
    %v2099 = vlaneseq
    %v2100 = vshrl.u32 %v2099, 7
    %v2101 = vsub.s32 %v1580, %v2100
    %v2102 = vrot.slane %v1993, %v2101
    %v2103 = vlaneseq
    %v2104 = vshrl.u32 %v2103, 7
    %v2105 = vsub.s32 %v1585, %v2104
    %v2106 = vrot.slane %v1996, %v2105
    %v2107 = vsel %vm1590, %v2106, %v2102
    %v2108 = vlaneseq
    %v2109 = vshrl.u32 %v2108, 7
    %v2110 = vsub.s32 %v1580, %v2109
    %v2111 = vrot.slane %v1999, %v2110
    %v2112 = vlaneseq
    %v2113 = vshrl.u32 %v2112, 7
    %v2114 = vsub.s32 %v1585, %v2113
    %v2115 = vrot.slane %v2002, %v2114
    %v2116 = vsel %vm1590, %v2115, %v2111
    %v2117 = vlaneseq
    %v2118 = vshrl.u32 %v2117, 7
    %v2119 = vsub.s32 %v1580, %v2118
    %v2120 = vrot.slane %v2005, %v2119
    %v2121 = vlaneseq
    %v2122 = vshrl.u32 %v2121, 7
    %v2123 = vsub.s32 %v1585, %v2122
    %v2124 = vrot.slane %v2008, %v2123
    %v2125 = vsel %vm1590, %v2124, %v2120
    %v2126 = vlaneseq
    %v2127 = vshrl.u32 %v2126, 7
    %v2128 = vsub.s32 %v1580, %v2127
    %v2129 = vrot.slane %v2011, %v2128
    %v2130 = vlaneseq
    %v2131 = vshrl.u32 %v2130, 7
    %v2132 = vsub.s32 %v1585, %v2131
    %v2133 = vrot.slane %v2014, %v2132
    %v2134 = vsel %vm1590, %v2133, %v2129
    %v2135 = vlaneseq
    %v2136 = vshrl.u32 %v2135, 7
    %v2137 = vsub.s32 %v1580, %v2136
    %v2138 = vrot.slane %v2017, %v2137
    %v2139 = vlaneseq
    %v2140 = vshrl.u32 %v2139, 7
    %v2141 = vsub.s32 %v1585, %v2140
    %v2142 = vrot.slane %v2020, %v2141
    %v2143 = vsel %vm1590, %v2142, %v2138
    %v2144 = vlaneseq
    %v2145 = vshrl.u32 %v2144, 7
    %v2146 = vsub.s32 %v1580, %v2145
    %v2147 = vrot.slane %v2023, %v2146
    %v2148 = vlaneseq
    %v2149 = vshrl.u32 %v2148, 7
    %v2150 = vsub.s32 %v1585, %v2149
    %v2151 = vrot.slane %v2026, %v2150
    %v2152 = vsel %vm1590, %v2151, %v2147
    %v2153 = vlaneseq
    %v2154 = vshrl.u32 %v2153, 7
    %v2155 = vsub.s32 %v1580, %v2154
    %v2156 = vrot.slane %v2029, %v2155
    %v2157 = vlaneseq
    %v2158 = vshrl.u32 %v2157, 7
    %v2159 = vsub.s32 %v1585, %v2158
    %v2160 = vrot.slane %v2032, %v2159
    %v2161 = vsel %vm1590, %v2160, %v2156
    %v2162 = vlaneseq
    %v2163 = vshrl.u32 %v2162, 7
    %v2164 = vsub.s32 %v1580, %v2163
    %v2165 = vrot.slane %v2035, %v2164
    %v2166 = vlaneseq
    %v2167 = vshrl.u32 %v2166, 7
    %v2168 = vsub.s32 %v1585, %v2167
    %v2169 = vrot.slane %v2038, %v2168
    %v2170 = vsel %vm1590, %v2169, %v2165
    %v2171 = vlaneseq
    %v2172 = vshrl.u32 %v2171, 7
    %v2173 = vsub.s32 %v1580, %v2172
    %v2174 = vrot.slane %v2041, %v2173
    %v2175 = vlaneseq
    %v2176 = vshrl.u32 %v2175, 7
    %v2177 = vsub.s32 %v1585, %v2176
    %v2178 = vrot.slane %v2044, %v2177
    %v2179 = vsel %vm1590, %v2178, %v2174
    %v2180 = vlaneseq
    %v2181 = vshrl.u32 %v2180, 7
    %v2182 = vsub.s32 %v1580, %v2181
    %v2183 = vrot.slane %v2047, %v2182
    %v2184 = vlaneseq
    %v2185 = vshrl.u32 %v2184, 7
    %v2186 = vsub.s32 %v1585, %v2185
    %v2187 = vrot.slane %v2050, %v2186
    %v2188 = vsel %vm1590, %v2187, %v2183
    %v2189 = vlaneseq
    %v2190 = vshrl.u32 %v2189, 7
    %v2191 = vsub.s32 %v1580, %v2190
    %v2192 = vrot.slane %v2053, %v2191
    %v2193 = vlaneseq
    %v2194 = vshrl.u32 %v2193, 7
    %v2195 = vsub.s32 %v1585, %v2194
    %v2196 = vrot.slane %v2056, %v2195
    %v2197 = vsel %vm1590, %v2196, %v2192
    %v2198 = vlaneseq
    %v2199 = vshrl.u32 %v2198, 7
    %v2200 = vsub.s32 %v1580, %v2199
    %v2201 = vrot.slane %v2059, %v2200
    %v2202 = vlaneseq
    %v2203 = vshrl.u32 %v2202, 7
    %v2204 = vsub.s32 %v1585, %v2203
    %v2205 = vrot.slane %v2062, %v2204
    %v2206 = vsel %vm1590, %v2205, %v2201
    %v2207 = vsel %vm1727, %v2080, %v2071
    %v2208 = vsel %vm1729, %v2089, %v2207
    %v2209 = vsel %vm1731, %v2098, %v2208
    %v2210 = vsel %vm1733, %v2107, %v2209
    %v2211 = vsel %vm1735, %v2116, %v2210
    %v2212 = vsel %vm1737, %v2125, %v2211
    %v2213 = vsel %vm1739, %v2134, %v2212
    %v2214 = vsel %vm1727, %v2152, %v2143
    %v2215 = vsel %vm1729, %v2161, %v2214
    %v2216 = vsel %vm1731, %v2170, %v2215
    %v2217 = vsel %vm1733, %v2179, %v2216
    %v2218 = vsel %vm1735, %v2188, %v2217
    %v2219 = vsel %vm1737, %v2197, %v2218
    %v2220 = vsel %vm1739, %v2206, %v2219
    %v2223 = vsel %vm1750, %v2213, 0.0
    %2224 = vadd.xlane.f32.xlu0 %v2223
    %v2225 = vpop.xlane.xlu0 %2224
    %v2226 = vsel %vm1750, %v2220, 0.0
    %2227 = vadd.xlane.f32.xlu0 %v2226
    %v2228 = vpop.xlane.xlu0 %2227
    %v2231 = vlaneseq
    %v2232 = vshrl.u32 %v2231, 7
    %v2233 = vsub.s32 0, %v2232
    %v2234 = vrot.slane %v2225, %v2233
    %v2235 = vlaneseq
    %v2236 = vshrl.u32 %v2235, 7
    %v2237 = vsub.s32 1, %v2236
    %v2238 = vrot.slane %v2225, %v2237
    %v2239 = vlaneseq
    %v2240 = vshrl.u32 %v2239, 7
    %v2241 = vsub.s32 2, %v2240
    %v2242 = vrot.slane %v2225, %v2241
    %v2243 = vlaneseq
    %v2244 = vshrl.u32 %v2243, 7
    %v2245 = vsub.s32 3, %v2244
    %v2246 = vrot.slane %v2225, %v2245
    %v2247 = vlaneseq
    %v2248 = vshrl.u32 %v2247, 7
    %v2249 = vsub.s32 4, %v2248
    %v2250 = vrot.slane %v2225, %v2249
    %v2251 = vlaneseq
    %v2252 = vshrl.u32 %v2251, 7
    %v2253 = vsub.s32 5, %v2252
    %v2254 = vrot.slane %v2225, %v2253
    %v2255 = vlaneseq
    %v2256 = vshrl.u32 %v2255, 7
    %v2257 = vsub.s32 6, %v2256
    %v2258 = vrot.slane %v2225, %v2257
    %v2259 = vlaneseq
    %v2260 = vshrl.u32 %v2259, 7
    %v2261 = vsub.s32 7, %v2260
    %v2262 = vrot.slane %v2225, %v2261
    %v2263 = vlaneseq
    %v2264 = vshrl.u32 %v2263, 7
    %v2265 = vsub.s32 0, %v2264
    %v2266 = vrot.slane %v2228, %v2265
    %v2267 = vlaneseq
    %v2268 = vshrl.u32 %v2267, 7
    %v2269 = vsub.s32 1, %v2268
    %v2270 = vrot.slane %v2228, %v2269
    %v2271 = vlaneseq
    %v2272 = vshrl.u32 %v2271, 7
    %v2273 = vsub.s32 2, %v2272
    %v2274 = vrot.slane %v2228, %v2273
    %v2275 = vlaneseq
    %v2276 = vshrl.u32 %v2275, 7
    %v2277 = vsub.s32 3, %v2276
    %v2278 = vrot.slane %v2228, %v2277
    %v2279 = vlaneseq
    %v2280 = vshrl.u32 %v2279, 7
    %v2281 = vsub.s32 4, %v2280
    %v2282 = vrot.slane %v2228, %v2281
    %v2283 = vlaneseq
    %v2284 = vshrl.u32 %v2283, 7
    %v2285 = vsub.s32 5, %v2284
    %v2286 = vrot.slane %v2228, %v2285
    %v2287 = vlaneseq
    %v2288 = vshrl.u32 %v2287, 7
    %v2289 = vsub.s32 6, %v2288
    %v2290 = vrot.slane %v2228, %v2289
    %v2291 = vlaneseq
    %v2292 = vshrl.u32 %v2291, 7
    %v2293 = vsub.s32 7, %v2292
    %v2294 = vrot.slane %v2228, %v2293
    %v2311 = vrcp.pop %v2234
    %v2312 = vmul.f32 %v1872, %v2311
    %v2313 = vmul.f32 %v1874, %v2311
    %v2314 = vrcp.pop %v2238
    %v2315 = vmul.f32 %v1876, %v2314
    %v2316 = vmul.f32 %v1878, %v2314
    %v2317 = vrcp.pop %v2242
    %v2318 = vmul.f32 %v1880, %v2317
    %v2319 = vmul.f32 %v1882, %v2317
    %v2320 = vrcp.pop %v2246
    %v2321 = vmul.f32 %v1884, %v2320
    %v2322 = vmul.f32 %v1886, %v2320
    %v2323 = vrcp.pop %v2250
    %v2324 = vmul.f32 %v1888, %v2323
    %v2325 = vmul.f32 %v1890, %v2323
    %v2326 = vrcp.pop %v2254
    %v2327 = vmul.f32 %v1892, %v2326
    %v2328 = vmul.f32 %v1894, %v2326
    %v2329 = vrcp.pop %v2258
    %v2330 = vmul.f32 %v1896, %v2329
    %v2331 = vmul.f32 %v1898, %v2329
    %v2332 = vrcp.pop %v2262
    %v2333 = vmul.f32 %v1900, %v2332
    %v2334 = vmul.f32 %v1902, %v2332
    %v2335 = vrcp.pop %v2266
    %v2336 = vmul.f32 %v1904, %v2335
    %v2337 = vmul.f32 %v1906, %v2335
    %v2338 = vrcp.pop %v2270
    %v2339 = vmul.f32 %v1908, %v2338
    %v2340 = vmul.f32 %v1910, %v2338
    %v2341 = vrcp.pop %v2274
    %v2342 = vmul.f32 %v1912, %v2341
    %v2343 = vmul.f32 %v1914, %v2341
    %v2344 = vrcp.pop %v2278
    %v2345 = vmul.f32 %v1916, %v2344
    %v2346 = vmul.f32 %v1918, %v2344
    %v2347 = vrcp.pop %v2282
    %v2348 = vmul.f32 %v1920, %v2347
    %v2349 = vmul.f32 %v1922, %v2347
    %v2350 = vrcp.pop %v2286
    %v2351 = vmul.f32 %v1924, %v2350
    %v2352 = vmul.f32 %v1926, %v2350
    %v2353 = vrcp.pop %v2290
    %v2354 = vmul.f32 %v1928, %v2353
    %v2355 = vmul.f32 %v1930, %v2353
    %v2356 = vrcp.pop %v2294
    %v2357 = vmul.f32 %v1932, %v2356
    %v2358 = vmul.f32 %v1934, %v2356
    %2360 = vset.pattern.permute.xlu0 0
    %2361 = vperm.xlu0 %2360, %v2312
    %v2362 = vpop.permute.xlu0 %2361
    %2365 = vset.pattern.permute.xlu0 0
    %2366 = vperm.xlu0 %2365, %v2313
    %v2367 = vpop.permute.xlu0 %2366
    %2370 = vset.pattern.permute.xlu0 0
    %2371 = vperm.xlu0 %2370, %v2315
    %v2372 = vpop.permute.xlu0 %2371
    %2375 = vset.pattern.permute.xlu0 0
    %2376 = vperm.xlu0 %2375, %v2316
    %v2377 = vpop.permute.xlu0 %2376
    %2380 = vset.pattern.permute.xlu0 0
    %2381 = vperm.xlu0 %2380, %v2318
    %v2382 = vpop.permute.xlu0 %2381
    %2385 = vset.pattern.permute.xlu0 0
    %2386 = vperm.xlu0 %2385, %v2319
    %v2387 = vpop.permute.xlu0 %2386
    %2390 = vset.pattern.permute.xlu0 0
    %2391 = vperm.xlu0 %2390, %v2321
    %v2392 = vpop.permute.xlu0 %2391
    %2395 = vset.pattern.permute.xlu0 0
    %2396 = vperm.xlu0 %2395, %v2322
    %v2397 = vpop.permute.xlu0 %2396
    %2400 = vset.pattern.permute.xlu0 0
    %2401 = vperm.xlu0 %2400, %v2324
    %v2402 = vpop.permute.xlu0 %2401
    %2405 = vset.pattern.permute.xlu0 0
    %2406 = vperm.xlu0 %2405, %v2325
    %v2407 = vpop.permute.xlu0 %2406
    %2410 = vset.pattern.permute.xlu0 0
    %2411 = vperm.xlu0 %2410, %v2327
    %v2412 = vpop.permute.xlu0 %2411
    %2415 = vset.pattern.permute.xlu0 0
    %2416 = vperm.xlu0 %2415, %v2328
    %v2417 = vpop.permute.xlu0 %2416
    %2420 = vset.pattern.permute.xlu0 0
    %2421 = vperm.xlu0 %2420, %v2330
    %v2422 = vpop.permute.xlu0 %2421
    %2425 = vset.pattern.permute.xlu0 0
    %2426 = vperm.xlu0 %2425, %v2331
    %v2427 = vpop.permute.xlu0 %2426
    %2430 = vset.pattern.permute.xlu0 0
    %2431 = vperm.xlu0 %2430, %v2333
    %v2432 = vpop.permute.xlu0 %2431
    %2435 = vset.pattern.permute.xlu0 0
    %2436 = vperm.xlu0 %2435, %v2334
    %v2437 = vpop.permute.xlu0 %2436
    %2440 = vset.pattern.permute.xlu0 0
    %2441 = vperm.xlu0 %2440, %v2336
    %v2442 = vpop.permute.xlu0 %2441
    %2445 = vset.pattern.permute.xlu0 0
    %2446 = vperm.xlu0 %2445, %v2337
    %v2447 = vpop.permute.xlu0 %2446
    %2450 = vset.pattern.permute.xlu0 0
    %2451 = vperm.xlu0 %2450, %v2339
    %v2452 = vpop.permute.xlu0 %2451
    %2455 = vset.pattern.permute.xlu0 0
    %2456 = vperm.xlu0 %2455, %v2340
    %v2457 = vpop.permute.xlu0 %2456
    %2460 = vset.pattern.permute.xlu0 0
    %2461 = vperm.xlu0 %2460, %v2342
    %v2462 = vpop.permute.xlu0 %2461
    %2465 = vset.pattern.permute.xlu0 0
    %2466 = vperm.xlu0 %2465, %v2343
    %v2467 = vpop.permute.xlu0 %2466
    %2470 = vset.pattern.permute.xlu0 0
    %2471 = vperm.xlu0 %2470, %v2345
    %v2472 = vpop.permute.xlu0 %2471
    %2475 = vset.pattern.permute.xlu0 0
    %2476 = vperm.xlu0 %2475, %v2346
    %v2477 = vpop.permute.xlu0 %2476
    %2480 = vset.pattern.permute.xlu0 0
    %2481 = vperm.xlu0 %2480, %v2348
    %v2482 = vpop.permute.xlu0 %2481
    %2485 = vset.pattern.permute.xlu0 0
    %2486 = vperm.xlu0 %2485, %v2349
    %v2487 = vpop.permute.xlu0 %2486
    %2490 = vset.pattern.permute.xlu0 0
    %2491 = vperm.xlu0 %2490, %v2351
    %v2492 = vpop.permute.xlu0 %2491
    %2495 = vset.pattern.permute.xlu0 0
    %2496 = vperm.xlu0 %2495, %v2352
    %v2497 = vpop.permute.xlu0 %2496
    %2500 = vset.pattern.permute.xlu0 0
    %2501 = vperm.xlu0 %2500, %v2354
    %v2502 = vpop.permute.xlu0 %2501
    %2505 = vset.pattern.permute.xlu0 0
    %2506 = vperm.xlu0 %2505, %v2355
    %v2507 = vpop.permute.xlu0 %2506
    %2510 = vset.pattern.permute.xlu0 0
    %2511 = vperm.xlu0 %2510, %v2357
    %v2512 = vpop.permute.xlu0 %2511
    %2515 = vset.pattern.permute.xlu0 0
    %2516 = vperm.xlu0 %2515, %v2358
    %v2517 = vpop.permute.xlu0 %2516
    %v2519 = vmul.f32 %v2362, %v926
    %v2520 = vmul.f32 %v2362, %v927
    %v2521 = vmul.f32 %v2367, %v928
    %v2522 = vmul.f32 %v2367, %v929
    %v2523 = vmul.f32 %v2372, %v930
    %v2524 = vmul.f32 %v2372, %v931
    %v2525 = vmul.f32 %v2377, %v932
    %v2526 = vmul.f32 %v2377, %v933
    %v2527 = vmul.f32 %v2382, %v934
    %v2528 = vmul.f32 %v2382, %v935
    %v2529 = vmul.f32 %v2387, %v936
    %v2530 = vmul.f32 %v2387, %v937
    %v2531 = vmul.f32 %v2392, %v938
    %v2532 = vmul.f32 %v2392, %v939
    %v2533 = vmul.f32 %v2397, %v940
    %v2534 = vmul.f32 %v2397, %v941
    %v2535 = vmul.f32 %v2402, %v942
    %v2536 = vmul.f32 %v2402, %v943
    %v2537 = vmul.f32 %v2407, %v944
    %v2538 = vmul.f32 %v2407, %v945
    %v2539 = vmul.f32 %v2412, %v946
    %v2540 = vmul.f32 %v2412, %v947
    %v2541 = vmul.f32 %v2417, %v948
    %v2542 = vmul.f32 %v2417, %v949
    %v2543 = vmul.f32 %v2422, %v950
    %v2544 = vmul.f32 %v2422, %v951
    %v2545 = vmul.f32 %v2427, %v952
    %v2546 = vmul.f32 %v2427, %v953
    %v2547 = vmul.f32 %v2432, %v954
    %v2548 = vmul.f32 %v2432, %v955
    %v2549 = vmul.f32 %v2437, %v956
    %v2550 = vmul.f32 %v2437, %v957
    %v2551 = vmul.f32 %v2442, %v958
    %v2552 = vmul.f32 %v2442, %v959
    %v2553 = vmul.f32 %v2447, %v960
    %v2554 = vmul.f32 %v2447, %v961
    %v2555 = vmul.f32 %v2452, %v962
    %v2556 = vmul.f32 %v2452, %v963
    %v2557 = vmul.f32 %v2457, %v964
    %v2558 = vmul.f32 %v2457, %v965
    %v2559 = vmul.f32 %v2462, %v966
    %v2560 = vmul.f32 %v2462, %v967
    %v2561 = vmul.f32 %v2467, %v968
    %v2562 = vmul.f32 %v2467, %v969
    %v2563 = vmul.f32 %v2472, %v970
    %v2564 = vmul.f32 %v2472, %v971
    %v2565 = vmul.f32 %v2477, %v972
    %v2566 = vmul.f32 %v2477, %v973
    %v2567 = vmul.f32 %v2482, %v974
    %v2568 = vmul.f32 %v2482, %v975
    %v2569 = vmul.f32 %v2487, %v976
    %v2570 = vmul.f32 %v2487, %v977
    %v2571 = vmul.f32 %v2492, %v978
    %v2572 = vmul.f32 %v2492, %v979
    %v2573 = vmul.f32 %v2497, %v980
    %v2574 = vmul.f32 %v2497, %v981
    %v2575 = vmul.f32 %v2502, %v982
    %v2576 = vmul.f32 %v2502, %v983
    %v2577 = vmul.f32 %v2507, %v984
    %v2578 = vmul.f32 %v2507, %v985
    %v2579 = vmul.f32 %v2512, %v986
    %v2580 = vmul.f32 %v2512, %v987
    %v2581 = vmul.f32 %v2517, %v988
    %v2582 = vmul.f32 %v2517, %v989
    %v2583 = vadd.f32 %v2519, %v2521
    %v2584 = vrot.slane %v2583, 4
    %v2585 = vadd.f32 %v2583, %v2584
    %v2586 = vrot.slane %v2585, 2
    %v2587 = vadd.f32 %v2585, %v2586
    %v2588 = vrot.slane %v2587, 1
    %v2589 = vadd.f32 %v2587, %v2588
    %v2590 = vadd.f32 %v2520, %v2522
    %v2591 = vrot.slane %v2590, 4
    %v2592 = vadd.f32 %v2590, %v2591
    %v2593 = vrot.slane %v2592, 2
    %v2594 = vadd.f32 %v2592, %v2593
    %v2595 = vrot.slane %v2594, 1
    %v2596 = vadd.f32 %v2594, %v2595
    %v2597 = vadd.f32 %v2523, %v2525
    %v2598 = vrot.slane %v2597, 4
    %v2599 = vadd.f32 %v2597, %v2598
    %v2600 = vrot.slane %v2599, 2
    %v2601 = vadd.f32 %v2599, %v2600
    %v2602 = vrot.slane %v2601, 1
    %v2603 = vadd.f32 %v2601, %v2602
    %v2604 = vadd.f32 %v2524, %v2526
    %v2605 = vrot.slane %v2604, 4
    %v2606 = vadd.f32 %v2604, %v2605
    %v2607 = vrot.slane %v2606, 2
    %v2608 = vadd.f32 %v2606, %v2607
    %v2609 = vrot.slane %v2608, 1
    %v2610 = vadd.f32 %v2608, %v2609
    %v2611 = vadd.f32 %v2527, %v2529
    %v2612 = vrot.slane %v2611, 4
    %v2613 = vadd.f32 %v2611, %v2612
    %v2614 = vrot.slane %v2613, 2
    %v2615 = vadd.f32 %v2613, %v2614
    %v2616 = vrot.slane %v2615, 1
    %v2617 = vadd.f32 %v2615, %v2616
    %v2618 = vadd.f32 %v2528, %v2530
    %v2619 = vrot.slane %v2618, 4
    %v2620 = vadd.f32 %v2618, %v2619
    %v2621 = vrot.slane %v2620, 2
    %v2622 = vadd.f32 %v2620, %v2621
    %v2623 = vrot.slane %v2622, 1
    %v2624 = vadd.f32 %v2622, %v2623
    %v2625 = vadd.f32 %v2531, %v2533
    %v2626 = vrot.slane %v2625, 4
    %v2627 = vadd.f32 %v2625, %v2626
    %v2628 = vrot.slane %v2627, 2
    %v2629 = vadd.f32 %v2627, %v2628
    %v2630 = vrot.slane %v2629, 1
    %v2631 = vadd.f32 %v2629, %v2630
    %v2632 = vadd.f32 %v2532, %v2534
    %v2633 = vrot.slane %v2632, 4
    %v2634 = vadd.f32 %v2632, %v2633
    %v2635 = vrot.slane %v2634, 2
    %v2636 = vadd.f32 %v2634, %v2635
    %v2637 = vrot.slane %v2636, 1
    %v2638 = vadd.f32 %v2636, %v2637
    %v2639 = vadd.f32 %v2535, %v2537
    %v2640 = vrot.slane %v2639, 4
    %v2641 = vadd.f32 %v2639, %v2640
    %v2642 = vrot.slane %v2641, 2
    %v2643 = vadd.f32 %v2641, %v2642
    %v2644 = vrot.slane %v2643, 1
    %v2645 = vadd.f32 %v2643, %v2644
    %v2646 = vadd.f32 %v2536, %v2538
    %v2647 = vrot.slane %v2646, 4
    %v2648 = vadd.f32 %v2646, %v2647
    %v2649 = vrot.slane %v2648, 2
    %v2650 = vadd.f32 %v2648, %v2649
    %v2651 = vrot.slane %v2650, 1
    %v2652 = vadd.f32 %v2650, %v2651
    %v2653 = vadd.f32 %v2539, %v2541
    %v2654 = vrot.slane %v2653, 4
    %v2655 = vadd.f32 %v2653, %v2654
    %v2656 = vrot.slane %v2655, 2
    %v2657 = vadd.f32 %v2655, %v2656
    %v2658 = vrot.slane %v2657, 1
    %v2659 = vadd.f32 %v2657, %v2658
    %v2660 = vadd.f32 %v2540, %v2542
    %v2661 = vrot.slane %v2660, 4
    %v2662 = vadd.f32 %v2660, %v2661
    %v2663 = vrot.slane %v2662, 2
    %v2664 = vadd.f32 %v2662, %v2663
    %v2665 = vrot.slane %v2664, 1
    %v2666 = vadd.f32 %v2664, %v2665
    %v2667 = vadd.f32 %v2543, %v2545
    %v2668 = vrot.slane %v2667, 4
    %v2669 = vadd.f32 %v2667, %v2668
    %v2670 = vrot.slane %v2669, 2
    %v2671 = vadd.f32 %v2669, %v2670
    %v2672 = vrot.slane %v2671, 1
    %v2673 = vadd.f32 %v2671, %v2672
    %v2674 = vadd.f32 %v2544, %v2546
    %v2675 = vrot.slane %v2674, 4
    %v2676 = vadd.f32 %v2674, %v2675
    %v2677 = vrot.slane %v2676, 2
    %v2678 = vadd.f32 %v2676, %v2677
    %v2679 = vrot.slane %v2678, 1
    %v2680 = vadd.f32 %v2678, %v2679
    %v2681 = vadd.f32 %v2547, %v2549
    %v2682 = vrot.slane %v2681, 4
    %v2683 = vadd.f32 %v2681, %v2682
    %v2684 = vrot.slane %v2683, 2
    %v2685 = vadd.f32 %v2683, %v2684
    %v2686 = vrot.slane %v2685, 1
    %v2687 = vadd.f32 %v2685, %v2686
    %v2688 = vadd.f32 %v2548, %v2550
    %v2689 = vrot.slane %v2688, 4
    %v2690 = vadd.f32 %v2688, %v2689
    %v2691 = vrot.slane %v2690, 2
    %v2692 = vadd.f32 %v2690, %v2691
    %v2693 = vrot.slane %v2692, 1
    %v2694 = vadd.f32 %v2692, %v2693
    %v2695 = vadd.f32 %v2551, %v2553
    %v2696 = vrot.slane %v2695, 4
    %v2697 = vadd.f32 %v2695, %v2696
    %v2698 = vrot.slane %v2697, 2
    %v2699 = vadd.f32 %v2697, %v2698
    %v2700 = vrot.slane %v2699, 1
    %v2701 = vadd.f32 %v2699, %v2700
    %v2702 = vadd.f32 %v2552, %v2554
    %v2703 = vrot.slane %v2702, 4
    %v2704 = vadd.f32 %v2702, %v2703
    %v2705 = vrot.slane %v2704, 2
    %v2706 = vadd.f32 %v2704, %v2705
    %v2707 = vrot.slane %v2706, 1
    %v2708 = vadd.f32 %v2706, %v2707
    %v2709 = vadd.f32 %v2555, %v2557
    %v2710 = vrot.slane %v2709, 4
    %v2711 = vadd.f32 %v2709, %v2710
    %v2712 = vrot.slane %v2711, 2
    %v2713 = vadd.f32 %v2711, %v2712
    %v2714 = vrot.slane %v2713, 1
    %v2715 = vadd.f32 %v2713, %v2714
    %v2716 = vadd.f32 %v2556, %v2558
    %v2717 = vrot.slane %v2716, 4
    %v2718 = vadd.f32 %v2716, %v2717
    %v2719 = vrot.slane %v2718, 2
    %v2720 = vadd.f32 %v2718, %v2719
    %v2721 = vrot.slane %v2720, 1
    %v2722 = vadd.f32 %v2720, %v2721
    %v2723 = vadd.f32 %v2559, %v2561
    %v2724 = vrot.slane %v2723, 4
    %v2725 = vadd.f32 %v2723, %v2724
    %v2726 = vrot.slane %v2725, 2
    %v2727 = vadd.f32 %v2725, %v2726
    %v2728 = vrot.slane %v2727, 1
    %v2729 = vadd.f32 %v2727, %v2728
    %v2730 = vadd.f32 %v2560, %v2562
    %v2731 = vrot.slane %v2730, 4
    %v2732 = vadd.f32 %v2730, %v2731
    %v2733 = vrot.slane %v2732, 2
    %v2734 = vadd.f32 %v2732, %v2733
    %v2735 = vrot.slane %v2734, 1
    %v2736 = vadd.f32 %v2734, %v2735
    %v2737 = vadd.f32 %v2563, %v2565
    %v2738 = vrot.slane %v2737, 4
    %v2739 = vadd.f32 %v2737, %v2738
    %v2740 = vrot.slane %v2739, 2
    %v2741 = vadd.f32 %v2739, %v2740
    %v2742 = vrot.slane %v2741, 1
    %v2743 = vadd.f32 %v2741, %v2742
    %v2744 = vadd.f32 %v2564, %v2566
    %v2745 = vrot.slane %v2744, 4
    %v2746 = vadd.f32 %v2744, %v2745
    %v2747 = vrot.slane %v2746, 2
    %v2748 = vadd.f32 %v2746, %v2747
    %v2749 = vrot.slane %v2748, 1
    %v2750 = vadd.f32 %v2748, %v2749
    %v2751 = vadd.f32 %v2567, %v2569
    %v2752 = vrot.slane %v2751, 4
    %v2753 = vadd.f32 %v2751, %v2752
    %v2754 = vrot.slane %v2753, 2
    %v2755 = vadd.f32 %v2753, %v2754
    %v2756 = vrot.slane %v2755, 1
    %v2757 = vadd.f32 %v2755, %v2756
    %v2758 = vadd.f32 %v2568, %v2570
    %v2759 = vrot.slane %v2758, 4
    %v2760 = vadd.f32 %v2758, %v2759
    %v2761 = vrot.slane %v2760, 2
    %v2762 = vadd.f32 %v2760, %v2761
    %v2763 = vrot.slane %v2762, 1
    %v2764 = vadd.f32 %v2762, %v2763
    %v2765 = vadd.f32 %v2571, %v2573
    %v2766 = vrot.slane %v2765, 4
    %v2767 = vadd.f32 %v2765, %v2766
    %v2768 = vrot.slane %v2767, 2
    %v2769 = vadd.f32 %v2767, %v2768
    %v2770 = vrot.slane %v2769, 1
    %v2771 = vadd.f32 %v2769, %v2770
    %v2772 = vadd.f32 %v2572, %v2574
    %v2773 = vrot.slane %v2772, 4
    %v2774 = vadd.f32 %v2772, %v2773
    %v2775 = vrot.slane %v2774, 2
    %v2776 = vadd.f32 %v2774, %v2775
    %v2777 = vrot.slane %v2776, 1
    %v2778 = vadd.f32 %v2776, %v2777
    %v2779 = vadd.f32 %v2575, %v2577
    %v2780 = vrot.slane %v2779, 4
    %v2781 = vadd.f32 %v2779, %v2780
    %v2782 = vrot.slane %v2781, 2
    %v2783 = vadd.f32 %v2781, %v2782
    %v2784 = vrot.slane %v2783, 1
    %v2785 = vadd.f32 %v2783, %v2784
    %v2786 = vadd.f32 %v2576, %v2578
    %v2787 = vrot.slane %v2786, 4
    %v2788 = vadd.f32 %v2786, %v2787
    %v2789 = vrot.slane %v2788, 2
    %v2790 = vadd.f32 %v2788, %v2789
    %v2791 = vrot.slane %v2790, 1
    %v2792 = vadd.f32 %v2790, %v2791
    %v2793 = vadd.f32 %v2579, %v2581
    %v2794 = vrot.slane %v2793, 4
    %v2795 = vadd.f32 %v2793, %v2794
    %v2796 = vrot.slane %v2795, 2
    %v2797 = vadd.f32 %v2795, %v2796
    %v2798 = vrot.slane %v2797, 1
    %v2799 = vadd.f32 %v2797, %v2798
    %v2800 = vadd.f32 %v2580, %v2582
    %v2801 = vrot.slane %v2800, 4
    %v2802 = vadd.f32 %v2800, %v2801
    %v2803 = vrot.slane %v2802, 2
    %v2804 = vadd.f32 %v2802, %v2803
    %v2805 = vrot.slane %v2804, 1
    %v2806 = vadd.f32 %v2804, %v2805
    %v2839 = vsel %vm1727, %v2603, %v2589
    %v2840 = vsel %vm1729, %v2617, %v2839
    %v2841 = vsel %vm1731, %v2631, %v2840
    %v2842 = vsel %vm1733, %v2645, %v2841
    %v2843 = vsel %vm1735, %v2659, %v2842
    %v2844 = vsel %vm1737, %v2673, %v2843
    %v2845 = vsel %vm1739, %v2687, %v2844
    %v2846 = vsel %vm1727, %v2610, %v2596
    %v2847 = vsel %vm1729, %v2624, %v2846
    %v2848 = vsel %vm1731, %v2638, %v2847
    %v2849 = vsel %vm1733, %v2652, %v2848
    %v2850 = vsel %vm1735, %v2666, %v2849
    %v2851 = vsel %vm1737, %v2680, %v2850
    %v2852 = vsel %vm1739, %v2694, %v2851
    %v2853 = vsel %vm1727, %v2715, %v2701
    %v2854 = vsel %vm1729, %v2729, %v2853
    %v2855 = vsel %vm1731, %v2743, %v2854
    %v2856 = vsel %vm1733, %v2757, %v2855
    %v2857 = vsel %vm1735, %v2771, %v2856
    %v2858 = vsel %vm1737, %v2785, %v2857
    %v2859 = vsel %vm1739, %v2799, %v2858
    %v2860 = vsel %vm1727, %v2722, %v2708
    %v2861 = vsel %vm1729, %v2736, %v2860
    %v2862 = vsel %vm1731, %v2750, %v2861
    %v2863 = vsel %vm1733, %v2764, %v2862
    %v2864 = vsel %vm1735, %v2778, %v2863
    %v2865 = vsel %vm1737, %v2792, %v2864
    %v2866 = vsel %vm1739, %v2806, %v2865
    %2871 = vst [vmem:[#allocation8] sm:$0xff] %v2845
    %2872 = vst [vmem:[#allocation8 + $0x8] sm:$0xff] %v2852
    %2873 = vst [vmem:[#allocation8 + $0x10] sm:$0xff] %v2859
    %2874 = vst [vmem:[#allocation8 + $0x18] sm:$0xff] %v2866
    // Predicated region
    $region34: #{tpu_custom_call.1} parent=1 // pred_check
      _
    $region35: #{tpu_custom_call.1} parent=1 // pred_check_branch
      %2876 = sbr.rel (0) target = $region37
    $region36: #{tpu_custom_call.1} parent=1 // pred_region
      %s2878 = ssub.s32 512, 512
      %2879 = vsyncadd [#allocation4], %s2878
      %s2880 = sshll.u32 [#allocation8], 4
      %s2881 = int_to_ptr.vmem [resolvable:$true] %s2880
      %2886 = dma.vmem_to_hbm [thread:$0]  %s2881, 512, %s5, [#allocation4], 256, 256, 16
    $region37: #{tpu_custom_call.1} parent=1 // pred_fallthru
      _
    // Predicated region
    $region38: #{tpu_custom_call.1} parent=1 // pred_check
      _
    $region39: #{tpu_custom_call.1} parent=1 // pred_check_branch
      %2888 = sbr.rel (0) target = $region41
    $region40: #{tpu_custom_call.1} parent=1 // pred_region
      %2889 = dma.done [#allocation4], 512
    $region41: #{tpu_custom_call.1} parent=1 // pred_fallthru
      _
    %2890 = vsyncpa [#allocation3], 1
    %2891 = vsyncpa [#allocation6], 1
    %2892 = vsyncpa [#allocation4], 1

</llo_original>
